<compile_context>
chip_gen: v6e
topology: v6e:2x2x1
jax: 0.10.0
libtpu: 0.0.40
codegen_flags: <defaults>
</compile_context>

<pallas_src>
import functools
import math

import jax
import jax.numpy as jnp
from jax import lax
from jax.experimental import pallas as pl
from jax.experimental.pallas import tpu as pltpu


def _round_up(x, m):
    return ((x + m - 1) // m) * m


def _resnet1d_fused_kernel(x_ref, w1_ref, b1_ref, w2_ref, b2_ref, o_ref, act_ref,
                           *, dilations, res_scales, pad_top, length):
    """All n_depth ResConv1DBlocks, fused; activation resident in VMEM scratch.

    x_ref:   (1, L, C_in)                  memory dtype (f32 or bf16)
    w1_ref:  (n_depth, 3, C_in, C_state)   memory dtype (dilated 3-tap conv, tap-major)
    b1_ref:  (n_depth, 1, C_state)         f32
    w2_ref:  (n_depth, C_state, C_in)      memory dtype (1x1 conv)
    b2_ref:  (n_depth, 1, C_in)            f32
    o_ref:   (1, L, C_in)
    act_ref: (pad_top + L + pad_bot, C_in) f32 scratch; halo rows stay zero.
    """
    L = length
    mx_dtype = w1_ref.dtype                      # MXU operand dtype (bf16 or f32)

    # Scratch is not auto-initialised: zero it (halo rows must be zero for the
    # conv padding), then drop the activation into the 8-aligned centre in f32.
    act_ref[...] = jnp.zeros_like(act_ref)
    act_ref[pad_top:pad_top + L, :] = x_ref[0].astype(jnp.float32)

    # Static unroll over depth: dilations / res_scales are trace-time Python
    # constants, so every slice offset below is static.
    for blk, (d, rs) in enumerate(zip(dilations, res_scales)):
        w1b = w1_ref[blk]                        # (3, C_in, C_state)
        x_c = act_ref[pad_top:pad_top + L, :]    # centre slab (f32, residual input)

        # Dilated Conv1d(k=3) as three time-shifted MXU matmuls, f32 accumulation.
        # Operands are read straight off the scratch ref per tap.
        # TODO(synk): for C_in < 128 the three taps could be lane-concatenated into
        # a single (L, 3*C_in) matmul to better fill the MXU contraction.
        h = jnp.dot(act_ref[pad_top - d:pad_top - d + L, :].astype(mx_dtype),
                    w1b[0], preferred_element_type=jnp.float32)
        h = h + jnp.dot(x_c.astype(mx_dtype),
                        w1b[1], preferred_element_type=jnp.float32)
        h = h + jnp.dot(act_ref[pad_top + d:pad_top + d + L, :].astype(mx_dtype),
                        w1b[2], preferred_element_type=jnp.float32)
        h = jnp.maximum(h + b1_ref[blk], 0.0)    # bias + ReLU in f32

        # 1x1 Conv1d as a single matmul, fused bias + ReLU.
        y = jnp.dot(h.astype(mx_dtype), w2_ref[blk],
                    preferred_element_type=jnp.float32) + b2_ref[blk]
        y = jnp.maximum(y, 0.0)

        # Residual update in f32, written back into the resident centre slab.
        act_ref[pad_top:pad_top + L, :] = x_c + rs * y

    o_ref[0] = act_ref[pad_top:pad_top + L, :].astype(o_ref.dtype)


def resnet1d_forward(x_ncl, blocks, *, compute_dtype=None):
    """x_ncl: (B, n_in, L) as in the PyTorch module. Returns (B, n_in, L).

    compute_dtype: optional dtype (e.g. jnp.bfloat16) for the HBM/MXU path;
    accumulation and the residual chain stay in f32 inside the kernel.
    """
    x_cl = jnp.transpose(x_ncl, (0, 2, 1))       # (B, L, C): channels on the lane axis
    B, L, C_in = x_cl.shape
    n_depth = len(blocks)
    C_state = blocks[0]["w1"].shape[-1]

    mem_dtype = x_cl.dtype if compute_dtype is None else jnp.dtype(compute_dtype)
    x_cl = x_cl.astype(mem_dtype)

    # Stack per-block weights so they stay VMEM-resident for the whole call.
    w1 = jnp.stack([b["w1"] for b in blocks]).astype(mem_dtype)    # (D, 3, C_in, C_state)
    b1 = jnp.stack([b["b1"] for b in blocks]).astype(jnp.float32)  # (D, 1, C_state)
    w2 = jnp.stack([b["w2"] for b in blocks]).astype(mem_dtype)    # (D, C_state, C_in)
    b2 = jnp.stack([b["b2"] for b in blocks]).astype(jnp.float32)  # (D, 1, C_in)
    dilations = tuple(int(b["dilation"]) for b in blocks)
    res_scales = tuple(float(b["res_scale"]) for b in blocks)

    d_max = max(dilations)
    pad_top = _round_up(d_max, 8)                # 8-aligned centre slab (sublane-aligned)
    pad_bot = d_max
    Lpad = pad_top + L + pad_bot

    kernel = functools.partial(_resnet1d_fused_kernel, dilations=dilations,
                               res_scales=res_scales, pad_top=pad_top, length=L)

    # Explicit VMEM budget (with generous margin) so the same kernel stays under
    # v7x's 64 MiB physical VMEM; demo shapes are far below this.
    itemsize = jnp.dtype(mem_dtype).itemsize
    need = (2 * 2 * L * C_in * itemsize                       # x/out tiles, double-buffered
            + 2 * (w1.size + w2.size) * itemsize              # resident weights
            + 2 * (b1.size + b2.size) * 4                     # biases
            + Lpad * C_in * 4)                                # f32 activation scratch
    vmem_limit = int(min(56 * 1024 * 1024, max(8 * 1024 * 1024, 4 * need)))

    # TODO(synk): for very long sequences add a time-tile grid axis with a
    # sum(2*dilation) halo; here the full sequence stays VMEM-resident per batch.
    y_cl = pl.pallas_call(
        kernel,
        out_shape=jax.ShapeDtypeStruct((B, L, C_in), mem_dtype),
        grid_spec=pltpu.PrefetchScalarGridSpec(
            num_scalar_prefetch=0,
            grid=(B,),
            in_specs=[
                pl.BlockSpec((1, L, C_in), lambda b: (b, 0, 0)),                # activations
                pl.BlockSpec((n_depth, 3, C_in, C_state), lambda b: (0, 0, 0, 0)),  # conv-3 W
                pl.BlockSpec((n_depth, 1, C_state), lambda b: (0, 0, 0)),       # conv-3 bias
                pl.BlockSpec((n_depth, C_state, C_in), lambda b: (0, 0, 0)),    # conv-1 W
                pl.BlockSpec((n_depth, 1, C_in), lambda b: (0, 0, 0)),          # conv-1 bias
            ],
            out_specs=pl.BlockSpec((1, L, C_in), lambda b: (b, 0, 0)),
            scratch_shapes=[pltpu.VMEM((Lpad, C_in), jnp.float32)],
        ),
        compiler_params=pltpu.CompilerParams(
            dimension_semantics=("parallel",),
            vmem_limit_bytes=vmem_limit,
        ),
    )(x_cl, w1, b1, w2, b2)

    return jnp.transpose(y_cl, (0, 2, 1))


def init_resnet1d_params(key, n_in, n_depth, m_conv=1.0, dilation_growth_rate=1,
                         dilation_cycle=None, res_scale=False, reverse_dilation=False):
    """Mirror Resnet1D.__init__: one ResConv1DBlock per depth."""
    n_state = int(m_conv * n_in)

    def _get_depth(depth):
        return depth if dilation_cycle is None else depth % dilation_cycle

    blocks = []
    for depth in range(n_depth):
        d = dilation_growth_rate ** _get_depth(depth)
        rs = 1.0 if not res_scale else 1.0 / math.sqrt(n_depth)
        key, k1, k2, k3, k4 = jax.random.split(key, 5)
        # PyTorch Conv1d default init: U(-1/sqrt(fan_in), 1/sqrt(fan_in)).
        bound1 = 1.0 / math.sqrt(n_in * 3)
        w1 = jax.random.uniform(k1, (3, n_in, n_state), jnp.float32, -bound1, bound1)
        b1 = jax.random.uniform(k2, (1, n_state), jnp.float32, -bound1, bound1)
        bound2 = 1.0 / math.sqrt(n_state)
        w2 = jax.random.uniform(k3, (n_state, n_in), jnp.float32, -bound2, bound2)
        b2 = jax.random.uniform(k4, (1, n_in), jnp.float32, -bound2, bound2)
        blocks.append(dict(w1=w1, b1=b1, w2=w2, b2=b2, dilation=int(d), res_scale=rs))
    if reverse_dilation:
        blocks = blocks[::-1]
    # TODO(synk): checkpoint_res (gradient checkpointing) is training-only; forward math unchanged.
    return blocks


def resnet1d_reference(x_ncl, blocks):
    """Pure-JAX (XLA) reference implementation for correctness checking."""
    x = x_ncl
    for blk in blocks:
        d = blk["dilation"]
        w1_oiw = jnp.transpose(blk["w1"], (2, 1, 0))    # (C_state, C_in, 3) == torch layout
        h = lax.conv_general_dilated(
            x, w1_oiw, window_strides=(1,), padding=[(d, d)],
            rhs_dilation=(d,), dimension_numbers=("NCH", "OIH", "NCH"))
        h = jnp.maximum(h + blk["b1"].reshape(1, -1, 1), 0.0)
        y = jnp.einsum("bcl,cd->bdl", h, blk["w2"]) + blk["b2"].reshape(1, -1, 1)
        y = jnp.maximum(y, 0.0)
        x = x + blk["res_scale"] * y
    return x


if __name__ == "__main__":
    key = jax.random.PRNGKey(0)
    kx, kp = jax.random.split(key)

    B, n_in, L = 2, 32, 64
    n_depth = 3
    x = jax.random.normal(kx, (B, n_in, L), dtype=jnp.float32)

    blocks = init_resnet1d_params(kp, n_in=n_in, n_depth=n_depth, m_conv=1.0,
                                  dilation_growth_rate=2, dilation_cycle=None,
                                  res_scale=False, reverse_dilation=False)

    y_ref = jax.block_until_ready(resnet1d_reference(x, blocks))

    # f32 memory path: strict check against the XLA reference.
    fwd_f32 = jax.jit(functools.partial(resnet1d_forward, blocks=blocks))
    y = jax.block_until_ready(fwd_f32(x))
    assert y.shape == x.shape and y.dtype == x.dtype
    err = float(jnp.max(jnp.abs(y - y_ref)))
    assert jnp.allclose(y, y_ref, atol=1e-3, rtol=1e-3), f"f32 max abs err {err}"

    # bf16 HBM/MXU path (f32 residual accumulation inside the kernel): loose check.
    fwd_bf16 = jax.jit(functools.partial(resnet1d_forward, blocks=blocks,
                                         compute_dtype=jnp.bfloat16))
    y_b = jax.block_until_ready(fwd_bf16(x))
    err_b = float(jnp.max(jnp.abs(y_b.astype(jnp.float32) - y_ref)))
    assert err_b < 5e-2, f"bf16 max abs err {err_b}"

    print("KERNEL_OK")
</pallas_src>

<mosaic_0001>
module attributes {stable_mosaic.version = 11 : i64} {
  func.func @_resnet1d_fused_kernel(%arg0: i32, %arg1: memref<1x64x32xf32, #tpu.memory_space<vmem>>, %arg2: memref<3x3x32x32xf32, #tpu.memory_space<vmem>>, %arg3: memref<3x1x32xf32, #tpu.memory_space<vmem>>, %arg4: memref<3x32x32xf32, #tpu.memory_space<vmem>>, %arg5: memref<3x1x32xf32, #tpu.memory_space<vmem>>, %arg6: memref<1x64x32xf32, #tpu.memory_space<vmem>>, %arg7: memref<76x32xf32, #tpu.memory_space<vmem>>) attributes {dimension_semantics = [#tpu.dimension_semantics<parallel>], iteration_bounds = array<i64: 2>, scalar_prefetch = 0 : i64, scratch_operands = 1 : i64, tpu.core_type = #tpu.core_type<tc>, window_params = [{transform_indices = @transform_0, window_bounds = array<i64: 1, 64, 32>}, {pipeline_mode = #tpu.pipeline_mode<synchronous>, transform_indices = @transform_1, window_bounds = array<i64: 3, 3, 32, 32>}, {pipeline_mode = #tpu.pipeline_mode<synchronous>, transform_indices = @transform_2, window_bounds = array<i64: 3, 1, 32>}, {pipeline_mode = #tpu.pipeline_mode<synchronous>, transform_indices = @transform_3, window_bounds = array<i64: 3, 32, 32>}, {pipeline_mode = #tpu.pipeline_mode<synchronous>, transform_indices = @transform_4, window_bounds = array<i64: 3, 1, 32>}, {transform_indices = @transform_5, window_bounds = array<i64: 1, 64, 32>}]} {
    %cst = arith.constant 0.000000e+00 : f32
    %0 = vector.broadcast %cst : f32 to vector<76x32xf32>
    %c0 = arith.constant 0 : index
    %c0_0 = arith.constant 0 : index
    %1 = vector.load %arg7[%c0, %c0_0] : memref<76x32xf32, #tpu.memory_space<vmem>>, vector<76x32xf32>
    tpu.vector_store %arg7[%c0, %c0_0], %0 {strides = array<i32>} : memref<76x32xf32, #tpu.memory_space<vmem>>, vector<76x32xf32>,
    %c0_1 = arith.constant 0 : index
    %c0_2 = arith.constant 0 : index
    %c0_3 = arith.constant 0 : index
    %2 = vector.load %arg1[%c0_1, %c0_2, %c0_3] : memref<1x64x32xf32, #tpu.memory_space<vmem>>, vector<1x64x32xf32>
    %3 = vector.shape_cast %2 : vector<1x64x32xf32> to vector<64x32xf32>
    %c8 = arith.constant 8 : index
    %c0_4 = arith.constant 0 : index
    %4 = vector.load %arg7[%c8, %c0_4] : memref<76x32xf32, #tpu.memory_space<vmem>>, vector<64x32xf32>
    tpu.vector_store %arg7[%c8, %c0_4], %3 {strides = array<i32>} : memref<76x32xf32, #tpu.memory_space<vmem>>, vector<64x32xf32>,
    %c0_5 = arith.constant 0 : index
    %c0_6 = arith.constant 0 : index
    %c0_7 = arith.constant 0 : index
    %c0_8 = arith.constant 0 : index
    %5 = vector.load %arg2[%c0_5, %c0_6, %c0_7, %c0_8] : memref<3x3x32x32xf32, #tpu.memory_space<vmem>>, vector<1x3x32x32xf32>
    %6 = vector.shape_cast %5 : vector<1x3x32x32xf32> to vector<3x32x32xf32>
    %c8_9 = arith.constant 8 : index
    %c0_10 = arith.constant 0 : index
    %7 = vector.load %arg7[%c8_9, %c0_10] : memref<76x32xf32, #tpu.memory_space<vmem>>, vector<64x32xf32>
    %c7 = arith.constant 7 : index
    %c0_11 = arith.constant 0 : index
    %8 = vector.load %arg7[%c7, %c0_11] : memref<76x32xf32, #tpu.memory_space<vmem>>, vector<64x32xf32>
    %9 = vector.extract_strided_slice %6 {offsets = [0, 0, 0], sizes = [1, 32, 32], strides = [1, 1, 1]} : vector<3x32x32xf32> to vector<1x32x32xf32>
    %10 = vector.shape_cast %9 : vector<1x32x32xf32> to vector<32x32xf32>
    %cst_12 = arith.constant dense<0.000000e+00> : vector<64x32xf32>
    %11 = tpu.matmul %8, %10, %cst_12 {dimension_numbers = #tpu.dot_dimension_numbers<[1], [0], [0], [1], [0, 0, 1, 1], [], []>} : vector<64x32xf32>, vector<32x32xf32>, vector<64x32xf32> -> vector<64x32xf32>
    %12 = vector.extract_strided_slice %6 {offsets = [1, 0, 0], sizes = [1, 32, 32], strides = [1, 1, 1]} : vector<3x32x32xf32> to vector<1x32x32xf32>
    %13 = vector.shape_cast %12 : vector<1x32x32xf32> to vector<32x32xf32>
    %cst_13 = arith.constant dense<0.000000e+00> : vector<64x32xf32>
    %14 = tpu.matmul %7, %13, %cst_13 {dimension_numbers = #tpu.dot_dimension_numbers<[1], [0], [0], [1], [0, 0, 1, 1], [], []>} : vector<64x32xf32>, vector<32x32xf32>, vector<64x32xf32> -> vector<64x32xf32>
    %15 = arith.addf %11, %14 : vector<64x32xf32>
    %c9 = arith.constant 9 : index
    %c0_14 = arith.constant 0 : index
    %16 = vector.load %arg7[%c9, %c0_14] : memref<76x32xf32, #tpu.memory_space<vmem>>, vector<64x32xf32>
    %17 = vector.extract_strided_slice %6 {offsets = [2, 0, 0], sizes = [1, 32, 32], strides = [1, 1, 1]} : vector<3x32x32xf32> to vector<1x32x32xf32>
    %18 = vector.shape_cast %17 : vector<1x32x32xf32> to vector<32x32xf32>
    %cst_15 = arith.constant dense<0.000000e+00> : vector<64x32xf32>
    %19 = tpu.matmul %16, %18, %cst_15 {dimension_numbers = #tpu.dot_dimension_numbers<[1], [0], [0], [1], [0, 0, 1, 1], [], []>} : vector<64x32xf32>, vector<32x32xf32>, vector<64x32xf32> -> vector<64x32xf32>
    %20 = arith.addf %15, %19 : vector<64x32xf32>
    %c0_16 = arith.constant 0 : index
    %c0_17 = arith.constant 0 : index
    %c0_18 = arith.constant 0 : index
    %21 = vector.load %arg3[%c0_16, %c0_17, %c0_18] : memref<3x1x32xf32, #tpu.memory_space<vmem>>, vector<1x1x32xf32>
    %22 = vector.shape_cast %21 : vector<1x1x32xf32> to vector<1x32xf32>
    %23 = vector.broadcast %22 : vector<1x32xf32> to vector<64x32xf32>
    %24 = arith.addf %20, %23 : vector<64x32xf32>
    %cst_19 = arith.constant 0.000000e+00 : f32
    %25 = vector.broadcast %cst_19 : f32 to vector<64x32xf32>
    %26 = arith.maximumf %24, %25 : vector<64x32xf32>
    %c0_20 = arith.constant 0 : index
    %c0_21 = arith.constant 0 : index
    %c0_22 = arith.constant 0 : index
    %27 = vector.load %arg4[%c0_20, %c0_21, %c0_22] : memref<3x32x32xf32, #tpu.memory_space<vmem>>, vector<1x32x32xf32>
    %28 = vector.shape_cast %27 : vector<1x32x32xf32> to vector<32x32xf32>
    %cst_23 = arith.constant dense<0.000000e+00> : vector<64x32xf32>
    %29 = tpu.matmul %26, %28, %cst_23 {dimension_numbers = #tpu.dot_dimension_numbers<[1], [0], [0], [1], [0, 0, 1, 1], [], []>} : vector<64x32xf32>, vector<32x32xf32>, vector<64x32xf32> -> vector<64x32xf32>
    %c0_24 = arith.constant 0 : index
    %c0_25 = arith.constant 0 : index
    %c0_26 = arith.constant 0 : index
    %30 = vector.load %arg5[%c0_24, %c0_25, %c0_26] : memref<3x1x32xf32, #tpu.memory_space<vmem>>, vector<1x1x32xf32>
    %31 = vector.shape_cast %30 : vector<1x1x32xf32> to vector<1x32xf32>
    %32 = vector.broadcast %31 : vector<1x32xf32> to vector<64x32xf32>
    %33 = arith.addf %29, %32 : vector<64x32xf32>
    %cst_27 = arith.constant 0.000000e+00 : f32
    %34 = vector.broadcast %cst_27 : f32 to vector<64x32xf32>
    %35 = arith.maximumf %33, %34 : vector<64x32xf32>
    %cst_28 = arith.constant 1.000000e+00 : f32
    %36 = vector.broadcast %cst_28 : f32 to vector<64x32xf32>
    %37 = arith.mulf %36, %35 : vector<64x32xf32>
    %38 = arith.addf %7, %37 : vector<64x32xf32>
    %c8_29 = arith.constant 8 : index
    %c0_30 = arith.constant 0 : index
    %39 = vector.load %arg7[%c8_29, %c0_30] : memref<76x32xf32, #tpu.memory_space<vmem>>, vector<64x32xf32>
    tpu.vector_store %arg7[%c8_29, %c0_30], %38 {strides = array<i32>} : memref<76x32xf32, #tpu.memory_space<vmem>>, vector<64x32xf32>,
    %c1 = arith.constant 1 : index
    %c0_31 = arith.constant 0 : index
    %c0_32 = arith.constant 0 : index
    %c0_33 = arith.constant 0 : index
    %40 = vector.load %arg2[%c1, %c0_31, %c0_32, %c0_33] : memref<3x3x32x32xf32, #tpu.memory_space<vmem>>, vector<1x3x32x32xf32>
    %41 = vector.shape_cast %40 : vector<1x3x32x32xf32> to vector<3x32x32xf32>
    %c8_34 = arith.constant 8 : index
    %c0_35 = arith.constant 0 : index
    %42 = vector.load %arg7[%c8_34, %c0_35] : memref<76x32xf32, #tpu.memory_space<vmem>>, vector<64x32xf32>
    %c6 = arith.constant 6 : index
    %c0_36 = arith.constant 0 : index
    %43 = vector.load %arg7[%c6, %c0_36] : memref<76x32xf32, #tpu.memory_space<vmem>>, vector<64x32xf32>
    %44 = vector.extract_strided_slice %41 {offsets = [0, 0, 0], sizes = [1, 32, 32], strides = [1, 1, 1]} : vector<3x32x32xf32> to vector<1x32x32xf32>
    %45 = vector.shape_cast %44 : vector<1x32x32xf32> to vector<32x32xf32>
    %cst_37 = arith.constant dense<0.000000e+00> : vector<64x32xf32>
    %46 = tpu.matmul %43, %45, %cst_37 {dimension_numbers = #tpu.dot_dimension_numbers<[1], [0], [0], [1], [0, 0, 1, 1], [], []>} : vector<64x32xf32>, vector<32x32xf32>, vector<64x32xf32> -> vector<64x32xf32>
    %47 = vector.extract_strided_slice %41 {offsets = [1, 0, 0], sizes = [1, 32, 32], strides = [1, 1, 1]} : vector<3x32x32xf32> to vector<1x32x32xf32>
    %48 = vector.shape_cast %47 : vector<1x32x32xf32> to vector<32x32xf32>
    %cst_38 = arith.constant dense<0.000000e+00> : vector<64x32xf32>
    %49 = tpu.matmul %42, %48, %cst_38 {dimension_numbers = #tpu.dot_dimension_numbers<[1], [0], [0], [1], [0, 0, 1, 1], [], []>} : vector<64x32xf32>, vector<32x32xf32>, vector<64x32xf32> -> vector<64x32xf32>
    %50 = arith.addf %46, %49 : vector<64x32xf32>
    %c10 = arith.constant 10 : index
    %c0_39 = arith.constant 0 : index
    %51 = vector.load %arg7[%c10, %c0_39] : memref<76x32xf32, #tpu.memory_space<vmem>>, vector<64x32xf32>
    %52 = vector.extract_strided_slice %41 {offsets = [2, 0, 0], sizes = [1, 32, 32], strides = [1, 1, 1]} : vector<3x32x32xf32> to vector<1x32x32xf32>
    %53 = vector.shape_cast %52 : vector<1x32x32xf32> to vector<32x32xf32>
    %cst_40 = arith.constant dense<0.000000e+00> : vector<64x32xf32>
    %54 = tpu.matmul %51, %53, %cst_40 {dimension_numbers = #tpu.dot_dimension_numbers<[1], [0], [0], [1], [0, 0, 1, 1], [], []>} : vector<64x32xf32>, vector<32x32xf32>, vector<64x32xf32> -> vector<64x32xf32>
    %55 = arith.addf %50, %54 : vector<64x32xf32>
    %c1_41 = arith.constant 1 : index
    %c0_42 = arith.constant 0 : index
    %c0_43 = arith.constant 0 : index
    %56 = vector.load %arg3[%c1_41, %c0_42, %c0_43] : memref<3x1x32xf32, #tpu.memory_space<vmem>>, vector<1x1x32xf32>
    %57 = vector.shape_cast %56 : vector<1x1x32xf32> to vector<1x32xf32>
    %58 = vector.broadcast %57 : vector<1x32xf32> to vector<64x32xf32>
    %59 = arith.addf %55, %58 : vector<64x32xf32>
    %cst_44 = arith.constant 0.000000e+00 : f32
    %60 = vector.broadcast %cst_44 : f32 to vector<64x32xf32>
    %61 = arith.maximumf %59, %60 : vector<64x32xf32>
    %c1_45 = arith.constant 1 : index
    %c0_46 = arith.constant 0 : index
    %c0_47 = arith.constant 0 : index
    %62 = vector.load %arg4[%c1_45, %c0_46, %c0_47] : memref<3x32x32xf32, #tpu.memory_space<vmem>>, vector<1x32x32xf32>
    %63 = vector.shape_cast %62 : vector<1x32x32xf32> to vector<32x32xf32>
    %cst_48 = arith.constant dense<0.000000e+00> : vector<64x32xf32>
    %64 = tpu.matmul %61, %63, %cst_48 {dimension_numbers = #tpu.dot_dimension_numbers<[1], [0], [0], [1], [0, 0, 1, 1], [], []>} : vector<64x32xf32>, vector<32x32xf32>, vector<64x32xf32> -> vector<64x32xf32>
    %c1_49 = arith.constant 1 : index
    %c0_50 = arith.constant 0 : index
    %c0_51 = arith.constant 0 : index
    %65 = vector.load %arg5[%c1_49, %c0_50, %c0_51] : memref<3x1x32xf32, #tpu.memory_space<vmem>>, vector<1x1x32xf32>
    %66 = vector.shape_cast %65 : vector<1x1x32xf32> to vector<1x32xf32>
    %67 = vector.broadcast %66 : vector<1x32xf32> to vector<64x32xf32>
    %68 = arith.addf %64, %67 : vector<64x32xf32>
    %cst_52 = arith.constant 0.000000e+00 : f32
    %69 = vector.broadcast %cst_52 : f32 to vector<64x32xf32>
    %70 = arith.maximumf %68, %69 : vector<64x32xf32>
    %cst_53 = arith.constant 1.000000e+00 : f32
    %71 = vector.broadcast %cst_53 : f32 to vector<64x32xf32>
    %72 = arith.mulf %71, %70 : vector<64x32xf32>
    %73 = arith.addf %42, %72 : vector<64x32xf32>
    %c8_54 = arith.constant 8 : index
    %c0_55 = arith.constant 0 : index
    %74 = vector.load %arg7[%c8_54, %c0_55] : memref<76x32xf32, #tpu.memory_space<vmem>>, vector<64x32xf32>
    tpu.vector_store %arg7[%c8_54, %c0_55], %73 {strides = array<i32>} : memref<76x32xf32, #tpu.memory_space<vmem>>, vector<64x32xf32>,
    %c2 = arith.constant 2 : index
    %c0_56 = arith.constant 0 : index
    %c0_57 = arith.constant 0 : index
    %c0_58 = arith.constant 0 : index
    %75 = vector.load %arg2[%c2, %c0_56, %c0_57, %c0_58] : memref<3x3x32x32xf32, #tpu.memory_space<vmem>>, vector<1x3x32x32xf32>
    %76 = vector.shape_cast %75 : vector<1x3x32x32xf32> to vector<3x32x32xf32>
    %c8_59 = arith.constant 8 : index
    %c0_60 = arith.constant 0 : index
    %77 = vector.load %arg7[%c8_59, %c0_60] : memref<76x32xf32, #tpu.memory_space<vmem>>, vector<64x32xf32>
    %c4 = arith.constant 4 : index
    %c0_61 = arith.constant 0 : index
    %78 = vector.load %arg7[%c4, %c0_61] : memref<76x32xf32, #tpu.memory_space<vmem>>, vector<64x32xf32>
    %79 = vector.extract_strided_slice %76 {offsets = [0, 0, 0], sizes = [1, 32, 32], strides = [1, 1, 1]} : vector<3x32x32xf32> to vector<1x32x32xf32>
    %80 = vector.shape_cast %79 : vector<1x32x32xf32> to vector<32x32xf32>
    %cst_62 = arith.constant dense<0.000000e+00> : vector<64x32xf32>
    %81 = tpu.matmul %78, %80, %cst_62 {dimension_numbers = #tpu.dot_dimension_numbers<[1], [0], [0], [1], [0, 0, 1, 1], [], []>} : vector<64x32xf32>, vector<32x32xf32>, vector<64x32xf32> -> vector<64x32xf32>
    %82 = vector.extract_strided_slice %76 {offsets = [1, 0, 0], sizes = [1, 32, 32], strides = [1, 1, 1]} : vector<3x32x32xf32> to vector<1x32x32xf32>
    %83 = vector.shape_cast %82 : vector<1x32x32xf32> to vector<32x32xf32>
    %cst_63 = arith.constant dense<0.000000e+00> : vector<64x32xf32>
    %84 = tpu.matmul %77, %83, %cst_63 {dimension_numbers = #tpu.dot_dimension_numbers<[1], [0], [0], [1], [0, 0, 1, 1], [], []>} : vector<64x32xf32>, vector<32x32xf32>, vector<64x32xf32> -> vector<64x32xf32>
    %85 = arith.addf %81, %84 : vector<64x32xf32>
    %c12 = arith.constant 12 : index
    %c0_64 = arith.constant 0 : index
    %86 = vector.load %arg7[%c12, %c0_64] : memref<76x32xf32, #tpu.memory_space<vmem>>, vector<64x32xf32>
    %87 = vector.extract_strided_slice %76 {offsets = [2, 0, 0], sizes = [1, 32, 32], strides = [1, 1, 1]} : vector<3x32x32xf32> to vector<1x32x32xf32>
    %88 = vector.shape_cast %87 : vector<1x32x32xf32> to vector<32x32xf32>
    %cst_65 = arith.constant dense<0.000000e+00> : vector<64x32xf32>
    %89 = tpu.matmul %86, %88, %cst_65 {dimension_numbers = #tpu.dot_dimension_numbers<[1], [0], [0], [1], [0, 0, 1, 1], [], []>} : vector<64x32xf32>, vector<32x32xf32>, vector<64x32xf32> -> vector<64x32xf32>
    %90 = arith.addf %85, %89 : vector<64x32xf32>
    %c2_66 = arith.constant 2 : index
    %c0_67 = arith.constant 0 : index
    %c0_68 = arith.constant 0 : index
    %91 = vector.load %arg3[%c2_66, %c0_67, %c0_68] : memref<3x1x32xf32, #tpu.memory_space<vmem>>, vector<1x1x32xf32>
    %92 = vector.shape_cast %91 : vector<1x1x32xf32> to vector<1x32xf32>
    %93 = vector.broadcast %92 : vector<1x32xf32> to vector<64x32xf32>
    %94 = arith.addf %90, %93 : vector<64x32xf32>
    %cst_69 = arith.constant 0.000000e+00 : f32
    %95 = vector.broadcast %cst_69 : f32 to vector<64x32xf32>
    %96 = arith.maximumf %94, %95 : vector<64x32xf32>
    %c2_70 = arith.constant 2 : index
    %c0_71 = arith.constant 0 : index
    %c0_72 = arith.constant 0 : index
    %97 = vector.load %arg4[%c2_70, %c0_71, %c0_72] : memref<3x32x32xf32, #tpu.memory_space<vmem>>, vector<1x32x32xf32>
    %98 = vector.shape_cast %97 : vector<1x32x32xf32> to vector<32x32xf32>
    %cst_73 = arith.constant dense<0.000000e+00> : vector<64x32xf32>
    %99 = tpu.matmul %96, %98, %cst_73 {dimension_numbers = #tpu.dot_dimension_numbers<[1], [0], [0], [1], [0, 0, 1, 1], [], []>} : vector<64x32xf32>, vector<32x32xf32>, vector<64x32xf32> -> vector<64x32xf32>
    %c2_74 = arith.constant 2 : index
    %c0_75 = arith.constant 0 : index
    %c0_76 = arith.constant 0 : index
    %100 = vector.load %arg5[%c2_74, %c0_75, %c0_76] : memref<3x1x32xf32, #tpu.memory_space<vmem>>, vector<1x1x32xf32>
    %101 = vector.shape_cast %100 : vector<1x1x32xf32> to vector<1x32xf32>
    %102 = vector.broadcast %101 : vector<1x32xf32> to vector<64x32xf32>
    %103 = arith.addf %99, %102 : vector<64x32xf32>
    %cst_77 = arith.constant 0.000000e+00 : f32
    %104 = vector.broadcast %cst_77 : f32 to vector<64x32xf32>
    %105 = arith.maximumf %103, %104 : vector<64x32xf32>
    %cst_78 = arith.constant 1.000000e+00 : f32
    %106 = vector.broadcast %cst_78 : f32 to vector<64x32xf32>
    %107 = arith.mulf %106, %105 : vector<64x32xf32>
    %108 = arith.addf %77, %107 : vector<64x32xf32>
    %c8_79 = arith.constant 8 : index
    %c0_80 = arith.constant 0 : index
    %109 = vector.load %arg7[%c8_79, %c0_80] : memref<76x32xf32, #tpu.memory_space<vmem>>, vector<64x32xf32>
    tpu.vector_store %arg7[%c8_79, %c0_80], %108 {strides = array<i32>} : memref<76x32xf32, #tpu.memory_space<vmem>>, vector<64x32xf32>,
    %c8_81 = arith.constant 8 : index
    %c0_82 = arith.constant 0 : index
    %110 = vector.load %arg7[%c8_81, %c0_82] : memref<76x32xf32, #tpu.memory_space<vmem>>, vector<64x32xf32>
    %c0_83 = arith.constant 0 : index
    %c0_84 = arith.constant 0 : index
    %c0_85 = arith.constant 0 : index
    %111 = vector.load %arg6[%c0_83, %c0_84, %c0_85] : memref<1x64x32xf32, #tpu.memory_space<vmem>>, vector<1x64x32xf32>
    %112 = vector.shape_cast %111 : vector<1x64x32xf32> to vector<64x32xf32>
    %113 = vector.shape_cast %110 : vector<64x32xf32> to vector<1x64x32xf32>
    tpu.vector_store %arg6[%c0_83, %c0_84, %c0_85], %113 {strides = array<i32>} : memref<1x64x32xf32, #tpu.memory_space<vmem>>, vector<1x64x32xf32>,
    return
  }
  func.func @transform_0(%arg0: i32) -> (i32, i32, i32) {
    %c0_i32 = arith.constant 0 : i32
    %c0_i32_0 = arith.constant 0 : i32
    %c0_i32_1 = arith.constant 0 : i32
    return %arg0, %c0_i32, %c0_i32_0 : i32, i32, i32
  }
  func.func @transform_1(%arg0: i32) -> (i32, i32, i32, i32) {
    %c0_i32 = arith.constant 0 : i32
    %c0_i32_0 = arith.constant 0 : i32
    %c0_i32_1 = arith.constant 0 : i32
    %c0_i32_2 = arith.constant 0 : i32
    %c0_i32_3 = arith.constant 0 : i32
    return %c0_i32, %c0_i32_0, %c0_i32_1, %c0_i32_2 : i32, i32, i32, i32
  }
  func.func @transform_2(%arg0: i32) -> (i32, i32, i32) {
    %c0_i32 = arith.constant 0 : i32
    %c0_i32_0 = arith.constant 0 : i32
    %c0_i32_1 = arith.constant 0 : i32
    %c0_i32_2 = arith.constant 0 : i32
    return %c0_i32, %c0_i32_0, %c0_i32_1 : i32, i32, i32
  }
  func.func @transform_3(%arg0: i32) -> (i32, i32, i32) {
    %c0_i32 = arith.constant 0 : i32
    %c0_i32_0 = arith.constant 0 : i32
    %c0_i32_1 = arith.constant 0 : i32
    %c0_i32_2 = arith.constant 0 : i32
    return %c0_i32, %c0_i32_0, %c0_i32_1 : i32, i32, i32
  }
  func.func @transform_4(%arg0: i32) -> (i32, i32, i32) {
    %c0_i32 = arith.constant 0 : i32
    %c0_i32_0 = arith.constant 0 : i32
    %c0_i32_1 = arith.constant 0 : i32
    %c0_i32_2 = arith.constant 0 : i32
    return %c0_i32, %c0_i32_0, %c0_i32_1 : i32, i32, i32
  }
  func.func @transform_5(%arg0: i32) -> (i32, i32, i32) {
    %c0_i32 = arith.constant 0 : i32
    %c0_i32_0 = arith.constant 0 : i32
    %c0_i32_1 = arith.constant 0 : i32
    return %arg0, %c0_i32, %c0_i32_0 : i32, i32, i32
  }
}

</mosaic_0001>

<llo_original>
// kernel: resnet1d_forward.1
$region0: #{resnet1d_forward.1}
  #allocation0 [shape = 'u32[]', space=smem, size = 0x4, offset = 0x4, fixed_abs, tag = 'smem constant byte address 0x4 - core index']
  #allocation1 [shape = 'u32[144,128]{1,0:T(1,128)}', space=vmem, size = 0x12000, scoped, tag = 'internal scratch']
  #allocation2 [shape = 'f32[76,32]{1,0:T(8,128)}', space=vmem, size = 0xa000, scoped, tag = 'scratch operand']
  %s0 = inlined_call_operand.vmem [shape: f32[2,64,32], index: 0, kind: input, shape index: {}]
  %s1 = inlined_call_operand.hbm [shape: f32[3,3,32,32], index: 1, kind: input, shape index: {}]
  %s2 = inlined_call_operand.vmem [shape: f32[3,1,32], index: 2, kind: input, shape index: {}]
  %s3 = inlined_call_operand.vmem [shape: f32[3,32,32], index: 3, kind: input, shape index: {}]
  %s4 = inlined_call_operand.vmem [shape: f32[3,1,32], index: 4, kind: input, shape index: {}]
  %s5 = inlined_call_operand.vmem [shape: f32[2,64,32], index: 5, kind: output, shape index: {}]
  %s6 = sld [smem:[#allocation0]]
  $region57: #{resnet1d_forward.1} parent=0
    _
  %s8 = ssub.s32 1, %s6
  %s9 = scalar_select 0, %s8, %s6
  $region1: #{resnet1d_forward.1} parent=0
    #allocation3 [shape = 'u8[147456]{0}', space=vmem, size = 0x24000, scoped, tag = 'input window, operand 1, single buffered']
    #allocation4 [shape = 's32[2]{0}', space=sflag, size = 0x8, scoped, tag = 'scoped memory for resnet1d_forward.1']
    %10 = vsyncpa [#allocation4], 0
    loop: start=0, step=1, limit=4
    $region2: #{resnet1d_forward.1} parent=1 // loop_pre_header
      _
    $region3: #{resnet1d_forward.1} parent=1 // loop_header
      %s12 = sphi 0, %s16
      %p13 = scmp.ge.s32.totalorder %s12, 4
      %s22 = sphi 0, %s24
      %s25 = sphi 0, %s22
      %s26 = sphi 0, %s25
      %s42 = sphi 0, %s26
      %s46 = sphi 0, %s46
      %s48 = sphi 0, %s46
      %s49 = sphi 0, %s48
      %s63 = sphi 0, %s49
      %s67 = sphi 0, %s67
      %s69 = sphi 0, %s67
      %s70 = sphi 0, %s69
      %s84 = sphi 0, %s70
      %s88 = sphi 0, %s88
      %s90 = sphi 0, %s88
      %s91 = sphi 0, %s90
      %s105 = sphi 0, %s91
      %s109 = sphi 0, %s109
      %s111 = sphi 0, %s109
      %s112 = sphi 0, %s111
      %s126 = sphi 0, %s112
      %s132 = sphi 0, %s134
      %s135 = sphi 0, %s132
      %s136 = sphi 0, %s135
      %s152 = sphi 0, %s136
    $region4: #{resnet1d_forward.1} parent=1 // loop_header_branch
      %15 = sbr.rel (%p13) target = $region8
    $region5: #{resnet1d_forward.1} parent=1 // loop_body
      %s17 = ssub.s32 %s12, 1
      %s18 = ssub.s32 %s12, 2
      %s19 = sadd.s32 %s12, 1
      %s20 = ssub.s32 %s12, %s19
      %p21 = scmp.eq.s32.totalorder %s20, 0
      %s23 = sadd.s32 %s22, 1
      %s24 = scalar_select %p21, %s22, %s23
      %p27 = pneg %p21
      %p28 = scmp.eq.s32.totalorder %s12, 1
      %p29 = por %p27, %p28
      %p30 = scmp.ne.s32.totalorder %s22, %s25
      %p31 = scmp.eq.s32.totalorder %s12, 0
      %p32 = por %p30, %p31
      %p33 = scmp.ne.s32.totalorder %s22, %s25
      %p34 = scmp.eq.s32.totalorder %s17, 1
      %p35 = por %p33, %p34
      %p36 = scmp.ne.s32.totalorder %s25, %s26
      %p37 = scmp.eq.s32.totalorder %s17, 0
      %p38 = por %p36, %p37
      %p39 = scmp.ne.s32.totalorder %s25, %s26
      %p40 = scmp.eq.s32.totalorder %s18, 1
      %p41 = por %p39, %p40
      %p43 = scmp.ne.s32.totalorder %s26, %s42
      %p44 = scmp.eq.s32.totalorder %s18, 0
      %p45 = por %p43, %p44
      %s47 = sadd.s32 %s46, 1
      %p50 = scmp.eq.s32.totalorder %s12, 1
      %p51 = scmp.ne.s32.totalorder %s46, %s48
      %p52 = scmp.eq.s32.totalorder %s12, 0
      %p53 = por %p51, %p52
      %p54 = scmp.ne.s32.totalorder %s46, %s48
      %p55 = scmp.eq.s32.totalorder %s17, 1
      %p56 = por %p54, %p55
      %p57 = scmp.ne.s32.totalorder %s48, %s49
      %p58 = scmp.eq.s32.totalorder %s17, 0
      %p59 = por %p57, %p58
      %p60 = scmp.ne.s32.totalorder %s48, %s49
      %p61 = scmp.eq.s32.totalorder %s18, 1
      %p62 = por %p60, %p61
      %p64 = scmp.ne.s32.totalorder %s49, %s63
      %p65 = scmp.eq.s32.totalorder %s18, 0
      %p66 = por %p64, %p65
      %s68 = sadd.s32 %s67, 1
      %p71 = scmp.eq.s32.totalorder %s12, 1
      %p72 = scmp.ne.s32.totalorder %s67, %s69
      %p73 = scmp.eq.s32.totalorder %s12, 0
      %p74 = por %p72, %p73
      %p75 = scmp.ne.s32.totalorder %s67, %s69
      %p76 = scmp.eq.s32.totalorder %s17, 1
      %p77 = por %p75, %p76
      %p78 = scmp.ne.s32.totalorder %s69, %s70
      %p79 = scmp.eq.s32.totalorder %s17, 0
      %p80 = por %p78, %p79
      %p81 = scmp.ne.s32.totalorder %s69, %s70
      %p82 = scmp.eq.s32.totalorder %s18, 1
      %p83 = por %p81, %p82
      %p85 = scmp.ne.s32.totalorder %s70, %s84
      %p86 = scmp.eq.s32.totalorder %s18, 0
      %p87 = por %p85, %p86
      %s89 = sadd.s32 %s88, 1
      %p92 = scmp.eq.s32.totalorder %s12, 1
      %p93 = scmp.ne.s32.totalorder %s88, %s90
      %p94 = scmp.eq.s32.totalorder %s12, 0
      %p95 = por %p93, %p94
      %p96 = scmp.ne.s32.totalorder %s88, %s90
      %p97 = scmp.eq.s32.totalorder %s17, 1
      %p98 = por %p96, %p97
      %p99 = scmp.ne.s32.totalorder %s90, %s91
      %p100 = scmp.eq.s32.totalorder %s17, 0
      %p101 = por %p99, %p100
      %p102 = scmp.ne.s32.totalorder %s90, %s91
      %p103 = scmp.eq.s32.totalorder %s18, 1
      %p104 = por %p102, %p103
      %p106 = scmp.ne.s32.totalorder %s91, %s105
      %p107 = scmp.eq.s32.totalorder %s18, 0
      %p108 = por %p106, %p107
      %s110 = sadd.s32 %s109, 1
      %p113 = scmp.eq.s32.totalorder %s12, 1
      %p114 = scmp.ne.s32.totalorder %s109, %s111
      %p115 = scmp.eq.s32.totalorder %s12, 0
      %p116 = por %p114, %p115
      %p117 = scmp.ne.s32.totalorder %s109, %s111
      %p118 = scmp.eq.s32.totalorder %s17, 1
      %p119 = por %p117, %p118
      %p120 = scmp.ne.s32.totalorder %s111, %s112
      %p121 = scmp.eq.s32.totalorder %s17, 0
      %p122 = por %p120, %p121
      %p123 = scmp.ne.s32.totalorder %s111, %s112
      %p124 = scmp.eq.s32.totalorder %s18, 1
      %p125 = por %p123, %p124
      %p127 = scmp.ne.s32.totalorder %s112, %s126
      %p128 = scmp.eq.s32.totalorder %s18, 0
      %p129 = por %p127, %p128
      %s130 = ssub.s32 %s12, %s19
      %p131 = scmp.eq.s32.totalorder %s130, 0
      %s133 = sadd.s32 %s132, 1
      %s134 = scalar_select %p131, %s132, %s133
      %p137 = pneg %p131
      %p138 = scmp.eq.s32.totalorder %s12, 1
      %p139 = por %p137, %p138
      %p140 = scmp.ne.s32.totalorder %s132, %s135
      %p141 = scmp.eq.s32.totalorder %s12, 0
      %p142 = por %p140, %p141
      %p143 = scmp.ne.s32.totalorder %s132, %s135
      %p144 = scmp.eq.s32.totalorder %s17, 1
      %p145 = por %p143, %p144
      %p146 = scmp.ne.s32.totalorder %s135, %s136
      %p147 = scmp.eq.s32.totalorder %s17, 0
      %p148 = por %p146, %p147
      %p149 = scmp.ne.s32.totalorder %s135, %s136
      %p150 = scmp.eq.s32.totalorder %s18, 1
      %p151 = por %p149, %p150
      %p153 = scmp.ne.s32.totalorder %s136, %s152
      %p154 = scmp.eq.s32.totalorder %s18, 0
      %p155 = por %p153, %p154
      %p156 = scmp.le.s32.totalorder 1, %s12
      %p157 = scmp.lt.s32.totalorder %s12, 3
      %p158 = pnand %p156, %p157
      %p159 = pneg %p158
      // Predicated region
      $region9: #{resnet1d_forward.1} parent=5 // pred_check
        _
      $region10: #{resnet1d_forward.1} parent=5 // pred_check_branch
        %161 = sbr.rel (%p158) target = $region12
      $region11: #{resnet1d_forward.1} parent=5 // pred_region
        %s162 = ssub.s32 %s12, 1
        // Predicated region
        $region13: #{resnet1d_forward.1} parent=11 // pred_check
          %p163 = pneg %p59
        $region14: #{resnet1d_forward.1} parent=11 // pred_check_branch
          %165 = sbr.rel (%p163) target = $region16
        $region15: #{resnet1d_forward.1} parent=11 // pred_region
          %s167 = ssub.s32 4608, 4608
          %168 = vsyncadd [#allocation4], %s167
          %s169 = sshll.u32 [#allocation3], 4
          %s170 = int_to_ptr.vmem [resolvable:$true] %s169
          %175 = dma.hbm_to_vmem [thread:$0]  %s1, 4608, %s170, [#allocation4], 128, 128, 8
        $region16: #{resnet1d_forward.1} parent=11 // pred_fallthru
          _
        // Predicated region
        $region17: #{resnet1d_forward.1} parent=11 // pred_check
          %p176 = pneg %p80
        $region18: #{resnet1d_forward.1} parent=11 // pred_check_branch
          %178 = sbr.rel (%p176) target = $region20
        $region19: #{resnet1d_forward.1} parent=11 // pred_region
          _
        $region20: #{resnet1d_forward.1} parent=11 // pred_fallthru
          _
        // Predicated region
        $region21: #{resnet1d_forward.1} parent=11 // pred_check
          %p179 = pneg %p101
        $region22: #{resnet1d_forward.1} parent=11 // pred_check_branch
          %181 = sbr.rel (%p179) target = $region24
        $region23: #{resnet1d_forward.1} parent=11 // pred_region
          _
        $region24: #{resnet1d_forward.1} parent=11 // pred_fallthru
          _
        // Predicated region
        $region25: #{resnet1d_forward.1} parent=11 // pred_check
          %p182 = pneg %p122
        $region26: #{resnet1d_forward.1} parent=11 // pred_check_branch
          %184 = sbr.rel (%p182) target = $region28
        $region27: #{resnet1d_forward.1} parent=11 // pred_region
          _
        $region28: #{resnet1d_forward.1} parent=11 // pred_fallthru
          _
      $region12: #{resnet1d_forward.1} parent=5 // pred_fallthru
        _
      %p185 = scmp.lt.s32.totalorder %s12, 2
      // Predicated region
      $region29: #{resnet1d_forward.1} parent=5 // pred_check
        %p186 = pneg %p185
      $region30: #{resnet1d_forward.1} parent=5 // pred_check_branch
        %188 = sbr.rel (%p186) target = $region32
      $region31: #{resnet1d_forward.1} parent=5 // pred_region
        // Predicated region
        $region33: #{resnet1d_forward.1} parent=31 // pred_check
          %p189 = pneg %p32
        $region34: #{resnet1d_forward.1} parent=31 // pred_check_branch
          %191 = sbr.rel (%p189) target = $region36
        $region35: #{resnet1d_forward.1} parent=31 // pred_region
          %p192 = scmp.lt.s32.totalorder %s12, 1
          %s193 = scalar_select %p192, %s12, 1
          %s194 = smul.addr %s193, 8
          %s195 = smul.addr %s194, 8
          %s196 = scalar_lea.vmem %s0, %s195
        $region36: #{resnet1d_forward.1} parent=31 // pred_fallthru
          _
      $region32: #{resnet1d_forward.1} parent=5 // pred_fallthru
        _
      %p197 = scmp.le.s32.totalorder 1, %s12
      %p198 = scmp.lt.s32.totalorder %s12, 3
      %p199 = pnand %p197, %p198
      %p200 = pneg %p199
      // Predicated region
      $region37: #{resnet1d_forward.1} parent=5 // pred_check
        _
      $region38: #{resnet1d_forward.1} parent=5 // pred_check_branch
        %202 = sbr.rel (%p199) target = $region40
      $region39: #{resnet1d_forward.1} parent=5 // pred_region
        %s203 = ssub.s32 %s12, 1
        // Predicated region
        $region41: #{resnet1d_forward.1} parent=39 // pred_check
          %p204 = pneg %p59
        $region42: #{resnet1d_forward.1} parent=39 // pred_check_branch
          %206 = sbr.rel (%p204) target = $region44
        $region43: #{resnet1d_forward.1} parent=39 // pred_region
          %207 = dma.done [#allocation4], 4608
        $region44: #{resnet1d_forward.1} parent=39 // pred_fallthru
          _
        %p208 = scmp.lt.s32.totalorder %s17, 1
        %s209 = scalar_select %p208, %s17, 1
        %s210 = smul.addr %s209, 8
        %s211 = smul.addr %s210, 8
        %s212 = scalar_lea.vmem %s0, %s211
        %p213 = pneg %p38
        %p214 = pneg %p35
        %p215 = pneg %p59
        %p216 = pneg %p56
        %p217 = pneg %p80
        %p218 = pneg %p77
        %p219 = pneg %p101
        %p220 = pneg %p98
        %p221 = pneg %p122
        %p222 = pneg %p119
        %p223 = pneg %p148
        %p224 = pneg %p145
        %p225 = scmp.lt.s32.totalorder %s17, 1
        %s226 = scalar_select %p225, %s17, 1
        %s227 = smul.addr %s226, 8
        %s228 = smul.addr %s227, 8
        %s229 = scalar_lea.vmem %s5, %s228
        %p230 = scmp.lt.s32.totalorder %s17, 1
        %s231 = scalar_select %p230, %s17, 1
        %s232 = smul.addr %s231, 8
        %s233 = smul.addr %s232, 8
        %s234 = scalar_lea.vmem %s0, %s233
        %p235 = scmp.lt.s32.totalorder %s17, 1
        %s236 = scalar_select %p235, %s17, 1
        %s237 = smul.addr %s236, 8
        %s238 = smul.addr %s237, 8
        %s239 = scalar_lea.vmem %s5, %s238
        %vm240 = vcmask 261120
        %241 = vst.msk [vmem:[#allocation2] sm:$0xff] %vm240, 0.0
        %242 = vst.msk [vmem:[#allocation2 + $0x8] sm:$0xff] %vm240, 0.0
        %243 = vst.msk [vmem:[#allocation2 + $0x10] sm:$0xff] %vm240, 0.0
        %244 = vst.msk [vmem:[#allocation2 + $0x18] sm:$0xff] %vm240, 0.0
        %245 = vst.msk [vmem:[#allocation2 + $0x20] sm:$0xff] %vm240, 0.0
        %246 = vst.msk [vmem:[#allocation2 + $0x28] sm:$0xff] %vm240, 0.0
        %247 = vst.msk [vmem:[#allocation2 + $0x30] sm:$0xff] %vm240, 0.0
        %248 = vst.msk [vmem:[#allocation2 + $0x38] sm:$0xff] %vm240, 0.0
        %249 = vst.msk [vmem:[#allocation2 + $0x40] sm:$0xff] %vm240, 0.0
        %vm250 = vcmask 257024
        %251 = vst.msk [vmem:[#allocation2 + $0x48] sm:$0xf] %vm250, 0.0
        %v252 = vld [vmem:[%s234] sm:$0xff]
        %v253 = vld [vmem:[%s234 + $0x8] sm:$0xff]
        %v254 = vld [vmem:[%s234 + $0x10] sm:$0xff]
        %v255 = vld [vmem:[%s234 + $0x18] sm:$0xff]
        %v256 = vld [vmem:[%s234 + $0x20] sm:$0xff]
        %v257 = vld [vmem:[%s234 + $0x28] sm:$0xff]
        %v258 = vld [vmem:[%s234 + $0x30] sm:$0xff]
        %v259 = vld [vmem:[%s234 + $0x38] sm:$0xff]
        %260 = vst.msk [vmem:[#allocation2 + $0x8] sm:$0xff] %vm240, %v252
        %261 = vst.msk [vmem:[#allocation2 + $0x10] sm:$0xff] %vm240, %v253
        %262 = vst.msk [vmem:[#allocation2 + $0x18] sm:$0xff] %vm240, %v254
        %263 = vst.msk [vmem:[#allocation2 + $0x20] sm:$0xff] %vm240, %v255
        %264 = vst.msk [vmem:[#allocation2 + $0x28] sm:$0xff] %vm240, %v256
        %265 = vst.msk [vmem:[#allocation2 + $0x30] sm:$0xff] %vm240, %v257
        %266 = vst.msk [vmem:[#allocation2 + $0x38] sm:$0xff] %vm240, %v258
        %267 = vst.msk [vmem:[#allocation2 + $0x40] sm:$0xff] %vm240, %v259
        %v268 = vld [vmem:[#allocation3] sm:$0xff]
        %v269 = vld [vmem:[#allocation3 + $0x8] sm:$0xff]
        %v270 = vld [vmem:[#allocation3 + $0x10] sm:$0xff]
        %v271 = vld [vmem:[#allocation3 + $0x18] sm:$0xff]
        %v272 = vld [vmem:[#allocation3 + $0x20] sm:$0xff]
        %v273 = vld [vmem:[#allocation3 + $0x28] sm:$0xff]
        %v274 = vld [vmem:[#allocation3 + $0x30] sm:$0xff]
        %v275 = vld [vmem:[#allocation3 + $0x38] sm:$0xff]
        %v276 = vld [vmem:[#allocation3 + $0x40] sm:$0xff]
        %v277 = vld [vmem:[#allocation3 + $0x48] sm:$0xff]
        %v278 = vld [vmem:[#allocation3 + $0x50] sm:$0xff]
        %v279 = vld [vmem:[#allocation3 + $0x58] sm:$0xff]
        %v280 = vld [vmem:[#allocation2 + $0x8] sm:$0xff]
        %v281 = vld [vmem:[#allocation2 + $0x10] sm:$0xff]
        %v282 = vld [vmem:[#allocation2 + $0x18] sm:$0xff]
        %v283 = vld [vmem:[#allocation2 + $0x20] sm:$0xff]
        %v284 = vld [vmem:[#allocation2 + $0x28] sm:$0xff]
        %v285 = vld [vmem:[#allocation2 + $0x30] sm:$0xff]
        %v286 = vld [vmem:[#allocation2 + $0x38] sm:$0xff]
        %v287 = vld [vmem:[#allocation2 + $0x40] sm:$0xff]
        %v288 = vld [vmem:[#allocation2 + $0x7] sm:$0xff]
        %v289 = vld [vmem:[#allocation2 + $0xf] sm:$0xff]
        %v290 = vld [vmem:[#allocation2 + $0x17] sm:$0xff]
        %v291 = vld [vmem:[#allocation2 + $0x1f] sm:$0xff]
        %v292 = vld [vmem:[#allocation2 + $0x27] sm:$0xff]
        %v293 = vld [vmem:[#allocation2 + $0x2f] sm:$0xff]
        %v294 = vld [vmem:[#allocation2 + $0x37] sm:$0xff]
        %v295 = vld [vmem:[#allocation2 + $0x3f] sm:$0xff]
        %v297 = vsel %vm240, %v280, 0
        %v300 = vsel %vm240, %v281, 0
        %v303 = vsel %vm240, %v282, 0
        %v306 = vsel %vm240, %v283, 0
        %v309 = vsel %vm240, %v284, 0
        %v312 = vsel %vm240, %v285, 0
        %v315 = vsel %vm240, %v286, 0
        %v318 = vsel %vm240, %v287, 0
        %320 = vmatprep.subr.mxu0 0.0
        %321 = vmatpush1.msra.mxu0 0.0
        %322 = vmatprep.subr.mxu0 0.0
        %323 = vmatpush1.msra.mxu0 0.0
        %324 = vmatprep.subr.mxu0 0.0
        %325 = vmatpush1.msra.mxu0 0.0
        %326 = vmatprep.subr.mxu0 0.0
        %327 = vmatpush1.msra.mxu0 0.0
        %328 = vmatprep.subr.mxu0 0.0
        %329 = vmatpush1.msra.mxu0 0.0
        %330 = vmatprep.subr.mxu0 0.0
        %331 = vmatpush1.msra.mxu0 0.0
        %332 = vmatprep.subr.mxu0 0.0
        %333 = vmatpush1.msra.mxu0 0.0
        %334 = vmatprep.subr.mxu0 0.0
        %335 = vmatpush1.msra.mxu0 0.0
        %336 = vmatprep.subr.mxu0 0.0
        %337 = vmatpush1.msra.mxu0 0.0
        %338 = vmatprep.subr.mxu0 0.0
        %339 = vmatpush1.msra.mxu0 0.0
        %340 = vmatprep.subr.mxu0 0.0
        %341 = vmatpush1.msra.mxu0 0.0
        %342 = vmatprep.subr.mxu0 0.0
        %343 = vmatpush1.msra.mxu0 0.0
        %344 = vmatprep.subr.mxu0 0.0
        %345 = vmatpush1.msra.mxu0 %v275
        %346 = vmatprep.subr.mxu0 0.0
        %347 = vmatpush1.msra.mxu0 %v274
        %348 = vmatprep.subr.mxu0 0.0
        %349 = vmatpush1.msra.mxu0 %v273
        %350 = vmatprep.subr.mxu0 0.0
        %351 = vmatpush1.msra.mxu0 %v272
        %352 = vmatprep.subr.mxu0 0.0
        %353 = vmatpush2.msra.mxu0 0.0
        %354 = vmatprep.subr.mxu0 0.0
        %355 = vmatpush2.msra.mxu0 0.0
        %356 = vmatprep.subr.mxu0 0.0
        %357 = vmatpush2.msra.mxu0 0.0
        %358 = vmatprep.subr.mxu0 0.0
        %359 = vmatpush2.msra.mxu0 0.0
        %360 = vmatprep.subr.mxu0 0.0
        %361 = vmatpush2.msra.mxu0 0.0
        %362 = vmatprep.subr.mxu0 0.0
        %363 = vmatpush2.msra.mxu0 0.0
        %364 = vmatprep.subr.mxu0 0.0
        %365 = vmatpush2.msra.mxu0 0.0
        %366 = vmatprep.subr.mxu0 0.0
        %367 = vmatpush2.msra.mxu0 0.0
        %368 = vmatprep.subr.mxu0 0.0
        %369 = vmatpush2.msra.mxu0 0.0
        %370 = vmatprep.subr.mxu0 0.0
        %371 = vmatpush2.msra.mxu0 0.0
        %372 = vmatprep.subr.mxu0 0.0
        %373 = vmatpush2.msra.mxu0 0.0
        %374 = vmatprep.subr.mxu0 0.0
        %375 = vmatpush2.msra.mxu0 0.0
        %376 = vmatprep.subr.mxu0 0.0
        %377 = vmatpush2.msra.mxu0 0.0
        %378 = vmatprep.subr.mxu0 0.0
        %379 = vmatpush2.msra.mxu0 0.0
        %380 = vmatprep.subr.mxu0 0.0
        %381 = vmatpush2.msra.mxu0 0.0
        %382 = vmatprep.subr.mxu0 0.0
        %383 = vmatpush2.msra.mxu0 0.0
        %384 = vmatprep.mubr.f32.mxu0 0.0
        %385 = vmatmul.mubr.f32.gmra.mxu0 %v297
        %v386 = vpop.f32.mrf.mxu0
        %v387 = vadd.f32 0.0, %v386
        %v388 = vpop.f32.mrf.mxu0
        %389 = vmatprep.mubr.f32.mxu0 0.0
        %390 = vmatmul.mubr.f32.gmra.mxu0 %v300
        %v391 = vpop.f32.mrf.mxu0
        %v392 = vadd.f32 0.0, %v391
        %v393 = vpop.f32.mrf.mxu0
        %394 = vmatprep.mubr.f32.mxu0 0.0
        %395 = vmatmul.mubr.f32.gmra.mxu0 %v303
        %v396 = vpop.f32.mrf.mxu0
        %v397 = vadd.f32 0.0, %v396
        %v398 = vpop.f32.mrf.mxu0
        %399 = vmatprep.mubr.f32.mxu0 0.0
        %400 = vmatmul.mubr.f32.gmra.mxu0 %v306
        %v401 = vpop.f32.mrf.mxu0
        %v402 = vadd.f32 0.0, %v401
        %v403 = vpop.f32.mrf.mxu0
        %404 = vmatprep.mubr.f32.mxu0 0.0
        %405 = vmatmul.mubr.f32.gmra.mxu0 %v309
        %v406 = vpop.f32.mrf.mxu0
        %v407 = vadd.f32 0.0, %v406
        %v408 = vpop.f32.mrf.mxu0
        %409 = vmatprep.mubr.f32.mxu0 0.0
        %410 = vmatmul.mubr.f32.gmra.mxu0 %v312
        %v411 = vpop.f32.mrf.mxu0
        %v412 = vadd.f32 0.0, %v411
        %v413 = vpop.f32.mrf.mxu0
        %414 = vmatprep.mubr.f32.mxu0 0.0
        %415 = vmatmul.mubr.f32.gmra.mxu0 %v315
        %v416 = vpop.f32.mrf.mxu0
        %v417 = vadd.f32 0.0, %v416
        %v418 = vpop.f32.mrf.mxu0
        %419 = vmatprep.mubr.f32.mxu0 0.0
        %420 = vmatmul.mubr.f32.gmra.mxu0 %v318
        %v421 = vpop.f32.mrf.mxu0
        %v422 = vadd.f32 0.0, %v421
        %v423 = vpop.f32.mrf.mxu0
        %424 = vdwg.mxu0
        %v426 = vsel %vm240, %v288, 0
        %v429 = vsel %vm240, %v289, 0
        %v432 = vsel %vm240, %v290, 0
        %v435 = vsel %vm240, %v291, 0
        %v438 = vsel %vm240, %v292, 0
        %v441 = vsel %vm240, %v293, 0
        %v444 = vsel %vm240, %v294, 0
        %v447 = vsel %vm240, %v295, 0
        %449 = vmatprep.subr.mxu0 0.0
        %450 = vmatpush1.msra.mxu0 0.0
        %451 = vmatprep.subr.mxu0 0.0
        %452 = vmatpush1.msra.mxu0 0.0
        %453 = vmatprep.subr.mxu0 0.0
        %454 = vmatpush1.msra.mxu0 0.0
        %455 = vmatprep.subr.mxu0 0.0
        %456 = vmatpush1.msra.mxu0 0.0
        %457 = vmatprep.subr.mxu0 0.0
        %458 = vmatpush1.msra.mxu0 0.0
        %459 = vmatprep.subr.mxu0 0.0
        %460 = vmatpush1.msra.mxu0 0.0
        %461 = vmatprep.subr.mxu0 0.0
        %462 = vmatpush1.msra.mxu0 0.0
        %463 = vmatprep.subr.mxu0 0.0
        %464 = vmatpush1.msra.mxu0 0.0
        %465 = vmatprep.subr.mxu0 0.0
        %466 = vmatpush1.msra.mxu0 0.0
        %467 = vmatprep.subr.mxu0 0.0
        %468 = vmatpush1.msra.mxu0 0.0
        %469 = vmatprep.subr.mxu0 0.0
        %470 = vmatpush1.msra.mxu0 0.0
        %471 = vmatprep.subr.mxu0 0.0
        %472 = vmatpush1.msra.mxu0 0.0
        %473 = vmatprep.subr.mxu0 0.0
        %474 = vmatpush1.msra.mxu0 %v271
        %475 = vmatprep.subr.mxu0 0.0
        %476 = vmatpush1.msra.mxu0 %v270
        %477 = vmatprep.subr.mxu0 0.0
        %478 = vmatpush1.msra.mxu0 %v269
        %479 = vmatprep.subr.mxu0 0.0
        %480 = vmatpush1.msra.mxu0 %v268
        %481 = vmatprep.subr.mxu0 0.0
        %482 = vmatpush2.msra.mxu0 0.0
        %483 = vmatprep.subr.mxu0 0.0
        %484 = vmatpush2.msra.mxu0 0.0
        %485 = vmatprep.subr.mxu0 0.0
        %486 = vmatpush2.msra.mxu0 0.0
        %487 = vmatprep.subr.mxu0 0.0
        %488 = vmatpush2.msra.mxu0 0.0
        %489 = vmatprep.subr.mxu0 0.0
        %490 = vmatpush2.msra.mxu0 0.0
        %491 = vmatprep.subr.mxu0 0.0
        %492 = vmatpush2.msra.mxu0 0.0
        %493 = vmatprep.subr.mxu0 0.0
        %494 = vmatpush2.msra.mxu0 0.0
        %495 = vmatprep.subr.mxu0 0.0
        %496 = vmatpush2.msra.mxu0 0.0
        %497 = vmatprep.subr.mxu0 0.0
        %498 = vmatpush2.msra.mxu0 0.0
        %499 = vmatprep.subr.mxu0 0.0
        %500 = vmatpush2.msra.mxu0 0.0
        %501 = vmatprep.subr.mxu0 0.0
        %502 = vmatpush2.msra.mxu0 0.0
        %503 = vmatprep.subr.mxu0 0.0
        %504 = vmatpush2.msra.mxu0 0.0
        %505 = vmatprep.subr.mxu0 0.0
        %506 = vmatpush2.msra.mxu0 0.0
        %507 = vmatprep.subr.mxu0 0.0
        %508 = vmatpush2.msra.mxu0 0.0
        %509 = vmatprep.subr.mxu0 0.0
        %510 = vmatpush2.msra.mxu0 0.0
        %511 = vmatprep.subr.mxu0 0.0
        %512 = vmatpush2.msra.mxu0 0.0
        %513 = vmatprep.mubr.f32.mxu0 0.0
        %514 = vmatmul.mubr.f32.gmra.mxu0 %v426
        %v515 = vpop.f32.mrf.mxu0
        %v516 = vadd.f32 %v387, %v515
        %v517 = vpop.f32.mrf.mxu0
        %518 = vmatprep.mubr.f32.mxu0 0.0
        %519 = vmatmul.mubr.f32.gmra.mxu0 %v429
        %v520 = vpop.f32.mrf.mxu0
        %v521 = vadd.f32 %v392, %v520
        %v522 = vpop.f32.mrf.mxu0
        %523 = vmatprep.mubr.f32.mxu0 0.0
        %524 = vmatmul.mubr.f32.gmra.mxu0 %v432
        %v525 = vpop.f32.mrf.mxu0
        %v526 = vadd.f32 %v397, %v525
        %v527 = vpop.f32.mrf.mxu0
        %528 = vmatprep.mubr.f32.mxu0 0.0
        %529 = vmatmul.mubr.f32.gmra.mxu0 %v435
        %v530 = vpop.f32.mrf.mxu0
        %v531 = vadd.f32 %v402, %v530
        %v532 = vpop.f32.mrf.mxu0
        %533 = vmatprep.mubr.f32.mxu0 0.0
        %534 = vmatmul.mubr.f32.gmra.mxu0 %v438
        %v535 = vpop.f32.mrf.mxu0
        %v536 = vadd.f32 %v407, %v535
        %v537 = vpop.f32.mrf.mxu0
        %538 = vmatprep.mubr.f32.mxu0 0.0
        %539 = vmatmul.mubr.f32.gmra.mxu0 %v441
        %v540 = vpop.f32.mrf.mxu0
        %v541 = vadd.f32 %v412, %v540
        %v542 = vpop.f32.mrf.mxu0
        %543 = vmatprep.mubr.f32.mxu0 0.0
        %544 = vmatmul.mubr.f32.gmra.mxu0 %v444
        %v545 = vpop.f32.mrf.mxu0
        %v546 = vadd.f32 %v417, %v545
        %v547 = vpop.f32.mrf.mxu0
        %548 = vmatprep.mubr.f32.mxu0 0.0
        %549 = vmatmul.mubr.f32.gmra.mxu0 %v447
        %v550 = vpop.f32.mrf.mxu0
        %v551 = vadd.f32 %v422, %v550
        %v552 = vpop.f32.mrf.mxu0
        %553 = vdwg.mxu0
        %v554 = vld [vmem:[#allocation2 + $0x9] sm:$0xff]
        %v555 = vld [vmem:[#allocation2 + $0x11] sm:$0xff]
        %v556 = vld [vmem:[#allocation2 + $0x19] sm:$0xff]
        %v557 = vld [vmem:[#allocation2 + $0x21] sm:$0xff]
        %v558 = vld [vmem:[#allocation2 + $0x29] sm:$0xff]
        %v559 = vld [vmem:[#allocation2 + $0x31] sm:$0xff]
        %v560 = vld [vmem:[#allocation2 + $0x39] sm:$0xff]
        %v561 = vld [vmem:[#allocation2 + $0x41] sm:$0xff]
        %v563 = vsel %vm240, %v554, 0
        %v566 = vsel %vm240, %v555, 0
        %v569 = vsel %vm240, %v556, 0
        %v572 = vsel %vm240, %v557, 0
        %v575 = vsel %vm240, %v558, 0
        %v578 = vsel %vm240, %v559, 0
        %v581 = vsel %vm240, %v560, 0
        %v584 = vsel %vm240, %v561, 0
        %586 = vmatprep.subr.mxu0 0.0
        %587 = vmatpush1.msra.mxu0 0.0
        %588 = vmatprep.subr.mxu0 0.0
        %589 = vmatpush1.msra.mxu0 0.0
        %590 = vmatprep.subr.mxu0 0.0
        %591 = vmatpush1.msra.mxu0 0.0
        %592 = vmatprep.subr.mxu0 0.0
        %593 = vmatpush1.msra.mxu0 0.0
        %594 = vmatprep.subr.mxu0 0.0
        %595 = vmatpush1.msra.mxu0 0.0
        %596 = vmatprep.subr.mxu0 0.0
        %597 = vmatpush1.msra.mxu0 0.0
        %598 = vmatprep.subr.mxu0 0.0
        %599 = vmatpush1.msra.mxu0 0.0
        %600 = vmatprep.subr.mxu0 0.0
        %601 = vmatpush1.msra.mxu0 0.0
        %602 = vmatprep.subr.mxu0 0.0
        %603 = vmatpush1.msra.mxu0 0.0
        %604 = vmatprep.subr.mxu0 0.0
        %605 = vmatpush1.msra.mxu0 0.0
        %606 = vmatprep.subr.mxu0 0.0
        %607 = vmatpush1.msra.mxu0 0.0
        %608 = vmatprep.subr.mxu0 0.0
        %609 = vmatpush1.msra.mxu0 0.0
        %610 = vmatprep.subr.mxu0 0.0
        %611 = vmatpush1.msra.mxu0 %v279
        %612 = vmatprep.subr.mxu0 0.0
        %613 = vmatpush1.msra.mxu0 %v278
        %614 = vmatprep.subr.mxu0 0.0
        %615 = vmatpush1.msra.mxu0 %v277
        %616 = vmatprep.subr.mxu0 0.0
        %617 = vmatpush1.msra.mxu0 %v276
        %618 = vmatprep.subr.mxu0 0.0
        %619 = vmatpush2.msra.mxu0 0.0
        %620 = vmatprep.subr.mxu0 0.0
        %621 = vmatpush2.msra.mxu0 0.0
        %622 = vmatprep.subr.mxu0 0.0
        %623 = vmatpush2.msra.mxu0 0.0
        %624 = vmatprep.subr.mxu0 0.0
        %625 = vmatpush2.msra.mxu0 0.0
        %626 = vmatprep.subr.mxu0 0.0
        %627 = vmatpush2.msra.mxu0 0.0
        %628 = vmatprep.subr.mxu0 0.0
        %629 = vmatpush2.msra.mxu0 0.0
        %630 = vmatprep.subr.mxu0 0.0
        %631 = vmatpush2.msra.mxu0 0.0
        %632 = vmatprep.subr.mxu0 0.0
        %633 = vmatpush2.msra.mxu0 0.0
        %634 = vmatprep.subr.mxu0 0.0
        %635 = vmatpush2.msra.mxu0 0.0
        %636 = vmatprep.subr.mxu0 0.0
        %637 = vmatpush2.msra.mxu0 0.0
        %638 = vmatprep.subr.mxu0 0.0
        %639 = vmatpush2.msra.mxu0 0.0
        %640 = vmatprep.subr.mxu0 0.0
        %641 = vmatpush2.msra.mxu0 0.0
        %642 = vmatprep.subr.mxu0 0.0
        %643 = vmatpush2.msra.mxu0 0.0
        %644 = vmatprep.subr.mxu0 0.0
        %645 = vmatpush2.msra.mxu0 0.0
        %646 = vmatprep.subr.mxu0 0.0
        %647 = vmatpush2.msra.mxu0 0.0
        %648 = vmatprep.subr.mxu0 0.0
        %649 = vmatpush2.msra.mxu0 0.0
        %650 = vmatprep.mubr.f32.mxu0 0.0
        %651 = vmatmul.mubr.f32.gmra.mxu0 %v563
        %v652 = vpop.f32.mrf.mxu0
        %v653 = vadd.f32 0.0, %v652
        %v654 = vpop.f32.mrf.mxu0
        %655 = vmatprep.mubr.f32.mxu0 0.0
        %656 = vmatmul.mubr.f32.gmra.mxu0 %v566
        %v657 = vpop.f32.mrf.mxu0
        %v658 = vadd.f32 0.0, %v657
        %v659 = vpop.f32.mrf.mxu0
        %660 = vmatprep.mubr.f32.mxu0 0.0
        %661 = vmatmul.mubr.f32.gmra.mxu0 %v569
        %v662 = vpop.f32.mrf.mxu0
        %v663 = vadd.f32 0.0, %v662
        %v664 = vpop.f32.mrf.mxu0
        %665 = vmatprep.mubr.f32.mxu0 0.0
        %666 = vmatmul.mubr.f32.gmra.mxu0 %v572
        %v667 = vpop.f32.mrf.mxu0
        %v668 = vadd.f32 0.0, %v667
        %v669 = vpop.f32.mrf.mxu0
        %670 = vmatprep.mubr.f32.mxu0 0.0
        %671 = vmatmul.mubr.f32.gmra.mxu0 %v575
        %v672 = vpop.f32.mrf.mxu0
        %v673 = vadd.f32 0.0, %v672
        %v674 = vpop.f32.mrf.mxu0
        %675 = vmatprep.mubr.f32.mxu0 0.0
        %676 = vmatmul.mubr.f32.gmra.mxu0 %v578
        %v677 = vpop.f32.mrf.mxu0
        %v678 = vadd.f32 0.0, %v677
        %v679 = vpop.f32.mrf.mxu0
        %680 = vmatprep.mubr.f32.mxu0 0.0
        %681 = vmatmul.mubr.f32.gmra.mxu0 %v581
        %v682 = vpop.f32.mrf.mxu0
        %v683 = vadd.f32 0.0, %v682
        %v684 = vpop.f32.mrf.mxu0
        %685 = vmatprep.mubr.f32.mxu0 0.0
        %686 = vmatmul.mubr.f32.gmra.mxu0 %v584
        %v687 = vpop.f32.mrf.mxu0
        %v688 = vadd.f32 0.0, %v687
        %v689 = vpop.f32.mrf.mxu0
        %690 = vdwg.mxu0
        %v691 = vadd.f32 %v516, %v653
        %v692 = vadd.f32 %v521, %v658
        %v693 = vadd.f32 %v526, %v663
        %v694 = vadd.f32 %v531, %v668
        %v695 = vadd.f32 %v536, %v673
        %v696 = vadd.f32 %v541, %v678
        %v697 = vadd.f32 %v546, %v683
        %v698 = vadd.f32 %v551, %v688
        %v699 = vld [vmem:[%s2] sm:$0x1]
        %v701 = vlaneseq
        %v702 = vshrl.u32 %v701, 7
        %v703 = vsub.s32 0, %v702
        %v704 = vrot.slane %v699, %v703
        %v706 = vadd.f32 %v691, %v704
        %v707 = vadd.f32 %v692, %v704
        %v708 = vadd.f32 %v693, %v704
        %v709 = vadd.f32 %v694, %v704
        %v710 = vadd.f32 %v695, %v704
        %v711 = vadd.f32 %v696, %v704
        %v712 = vadd.f32 %v697, %v704
        %v713 = vadd.f32 %v698, %v704
        %v714 = vmax.f32 %v706, 0.0
        %v715 = vmax.f32 %v707, 0.0
        %v716 = vmax.f32 %v708, 0.0
        %v717 = vmax.f32 %v709, 0.0
        %v718 = vmax.f32 %v710, 0.0
        %v719 = vmax.f32 %v711, 0.0
        %v720 = vmax.f32 %v712, 0.0
        %v721 = vmax.f32 %v713, 0.0
        %v722 = vld [vmem:[%s3] sm:$0xff]
        %v723 = vld [vmem:[%s3 + $0x8] sm:$0xff]
        %v724 = vld [vmem:[%s3 + $0x10] sm:$0xff]
        %v725 = vld [vmem:[%s3 + $0x18] sm:$0xff]
        %v726 = vld [vmem:[%s4] sm:$0x1]
        %v728 = vlaneseq
        %v729 = vshrl.u32 %v728, 7
        %v730 = vsub.s32 0, %v729
        %v731 = vrot.slane %v726, %v730
        %v734 = vsel %vm240, %v714, 0
        %v737 = vsel %vm240, %v715, 0
        %v740 = vsel %vm240, %v716, 0
        %v743 = vsel %vm240, %v717, 0
        %v746 = vsel %vm240, %v718, 0
        %v749 = vsel %vm240, %v719, 0
        %v752 = vsel %vm240, %v720, 0
        %v755 = vsel %vm240, %v721, 0
        %757 = vmatprep.subr.mxu0 0.0
        %758 = vmatpush1.msra.mxu0 0.0
        %759 = vmatprep.subr.mxu0 0.0
        %760 = vmatpush1.msra.mxu0 0.0
        %761 = vmatprep.subr.mxu0 0.0
        %762 = vmatpush1.msra.mxu0 0.0
        %763 = vmatprep.subr.mxu0 0.0
        %764 = vmatpush1.msra.mxu0 0.0
        %765 = vmatprep.subr.mxu0 0.0
        %766 = vmatpush1.msra.mxu0 0.0
        %767 = vmatprep.subr.mxu0 0.0
        %768 = vmatpush1.msra.mxu0 0.0
        %769 = vmatprep.subr.mxu0 0.0
        %770 = vmatpush1.msra.mxu0 0.0
        %771 = vmatprep.subr.mxu0 0.0
        %772 = vmatpush1.msra.mxu0 0.0
        %773 = vmatprep.subr.mxu0 0.0
        %774 = vmatpush1.msra.mxu0 0.0
        %775 = vmatprep.subr.mxu0 0.0
        %776 = vmatpush1.msra.mxu0 0.0
        %777 = vmatprep.subr.mxu0 0.0
        %778 = vmatpush1.msra.mxu0 0.0
        %779 = vmatprep.subr.mxu0 0.0
        %780 = vmatpush1.msra.mxu0 0.0
        %781 = vmatprep.subr.mxu0 0.0
        %782 = vmatpush1.msra.mxu0 %v725
        %783 = vmatprep.subr.mxu0 0.0
        %784 = vmatpush1.msra.mxu0 %v724
        %785 = vmatprep.subr.mxu0 0.0
        %786 = vmatpush1.msra.mxu0 %v723
        %787 = vmatprep.subr.mxu0 0.0
        %788 = vmatpush1.msra.mxu0 %v722
        %789 = vmatprep.subr.mxu0 0.0
        %790 = vmatpush2.msra.mxu0 0.0
        %791 = vmatprep.subr.mxu0 0.0
        %792 = vmatpush2.msra.mxu0 0.0
        %793 = vmatprep.subr.mxu0 0.0
        %794 = vmatpush2.msra.mxu0 0.0
        %795 = vmatprep.subr.mxu0 0.0
        %796 = vmatpush2.msra.mxu0 0.0
        %797 = vmatprep.subr.mxu0 0.0
        %798 = vmatpush2.msra.mxu0 0.0
        %799 = vmatprep.subr.mxu0 0.0
        %800 = vmatpush2.msra.mxu0 0.0
        %801 = vmatprep.subr.mxu0 0.0
        %802 = vmatpush2.msra.mxu0 0.0
        %803 = vmatprep.subr.mxu0 0.0
        %804 = vmatpush2.msra.mxu0 0.0
        %805 = vmatprep.subr.mxu0 0.0
        %806 = vmatpush2.msra.mxu0 0.0
        %807 = vmatprep.subr.mxu0 0.0
        %808 = vmatpush2.msra.mxu0 0.0
        %809 = vmatprep.subr.mxu0 0.0
        %810 = vmatpush2.msra.mxu0 0.0
        %811 = vmatprep.subr.mxu0 0.0
        %812 = vmatpush2.msra.mxu0 0.0
        %813 = vmatprep.subr.mxu0 0.0
        %814 = vmatpush2.msra.mxu0 0.0
        %815 = vmatprep.subr.mxu0 0.0
        %816 = vmatpush2.msra.mxu0 0.0
        %817 = vmatprep.subr.mxu0 0.0
        %818 = vmatpush2.msra.mxu0 0.0
        %819 = vmatprep.subr.mxu0 0.0
        %820 = vmatpush2.msra.mxu0 0.0
        %821 = vmatprep.mubr.f32.mxu0 0.0
        %822 = vmatmul.mubr.f32.gmra.mxu0 %v734
        %v823 = vpop.f32.mrf.mxu0
        %v824 = vadd.f32 %v731, %v823
        %v825 = vpop.f32.mrf.mxu0
        %826 = vmatprep.mubr.f32.mxu0 0.0
        %827 = vmatmul.mubr.f32.gmra.mxu0 %v737
        %v828 = vpop.f32.mrf.mxu0
        %v829 = vadd.f32 %v731, %v828
        %v830 = vpop.f32.mrf.mxu0
        %831 = vmatprep.mubr.f32.mxu0 0.0
        %832 = vmatmul.mubr.f32.gmra.mxu0 %v740
        %v833 = vpop.f32.mrf.mxu0
        %v834 = vadd.f32 %v731, %v833
        %v835 = vpop.f32.mrf.mxu0
        %836 = vmatprep.mubr.f32.mxu0 0.0
        %837 = vmatmul.mubr.f32.gmra.mxu0 %v743
        %v838 = vpop.f32.mrf.mxu0
        %v839 = vadd.f32 %v731, %v838
        %v840 = vpop.f32.mrf.mxu0
        %841 = vmatprep.mubr.f32.mxu0 0.0
        %842 = vmatmul.mubr.f32.gmra.mxu0 %v746
        %v843 = vpop.f32.mrf.mxu0
        %v844 = vadd.f32 %v731, %v843
        %v845 = vpop.f32.mrf.mxu0
        %846 = vmatprep.mubr.f32.mxu0 0.0
        %847 = vmatmul.mubr.f32.gmra.mxu0 %v749
        %v848 = vpop.f32.mrf.mxu0
        %v849 = vadd.f32 %v731, %v848
        %v850 = vpop.f32.mrf.mxu0
        %851 = vmatprep.mubr.f32.mxu0 0.0
        %852 = vmatmul.mubr.f32.gmra.mxu0 %v752
        %v853 = vpop.f32.mrf.mxu0
        %v854 = vadd.f32 %v731, %v853
        %v855 = vpop.f32.mrf.mxu0
        %856 = vmatprep.mubr.f32.mxu0 0.0
        %857 = vmatmul.mubr.f32.gmra.mxu0 %v755
        %v858 = vpop.f32.mrf.mxu0
        %v859 = vadd.f32 %v731, %v858
        %v860 = vpop.f32.mrf.mxu0
        %861 = vdwg.mxu0
        %v862 = vmax.f32 %v824, 0.0
        %v863 = vmax.f32 %v829, 0.0
        %v864 = vmax.f32 %v834, 0.0
        %v865 = vmax.f32 %v839, 0.0
        %v866 = vmax.f32 %v844, 0.0
        %v867 = vmax.f32 %v849, 0.0
        %v868 = vmax.f32 %v854, 0.0
        %v869 = vmax.f32 %v859, 0.0
        %v870 = vadd.f32 %v280, %v862
        %v871 = vadd.f32 %v281, %v863
        %v872 = vadd.f32 %v282, %v864
        %v873 = vadd.f32 %v283, %v865
        %v874 = vadd.f32 %v284, %v866
        %v875 = vadd.f32 %v285, %v867
        %v876 = vadd.f32 %v286, %v868
        %v877 = vadd.f32 %v287, %v869
        %878 = vst.msk [vmem:[#allocation2 + $0x8] sm:$0xff] %vm240, %v870
        %879 = vst.msk [vmem:[#allocation2 + $0x10] sm:$0xff] %vm240, %v871
        %880 = vst.msk [vmem:[#allocation2 + $0x18] sm:$0xff] %vm240, %v872
        %881 = vst.msk [vmem:[#allocation2 + $0x20] sm:$0xff] %vm240, %v873
        %882 = vst.msk [vmem:[#allocation2 + $0x28] sm:$0xff] %vm240, %v874
        %883 = vst.msk [vmem:[#allocation2 + $0x30] sm:$0xff] %vm240, %v875
        %884 = vst.msk [vmem:[#allocation2 + $0x38] sm:$0xff] %vm240, %v876
        %885 = vst.msk [vmem:[#allocation2 + $0x40] sm:$0xff] %vm240, %v877
        %s886 = scalar_lea.vmem [#allocation3], 96
        %v887 = vld [vmem:[%s886] sm:$0xff]
        %v888 = vld [vmem:[%s886 + $0x8] sm:$0xff]
        %v889 = vld [vmem:[%s886 + $0x10] sm:$0xff]
        %v890 = vld [vmem:[%s886 + $0x18] sm:$0xff]
        %v891 = vld [vmem:[%s886 + $0x20] sm:$0xff]
        %v892 = vld [vmem:[%s886 + $0x28] sm:$0xff]
        %v893 = vld [vmem:[%s886 + $0x30] sm:$0xff]
        %v894 = vld [vmem:[%s886 + $0x38] sm:$0xff]
        %v895 = vld [vmem:[%s886 + $0x40] sm:$0xff]
        %v896 = vld [vmem:[%s886 + $0x48] sm:$0xff]
        %v897 = vld [vmem:[%s886 + $0x50] sm:$0xff]
        %v898 = vld [vmem:[%s886 + $0x58] sm:$0xff]
        %v899 = vld [vmem:[#allocation2 + $0x8] sm:$0xff]
        %v900 = vld [vmem:[#allocation2 + $0x10] sm:$0xff]
        %v901 = vld [vmem:[#allocation2 + $0x18] sm:$0xff]
        %v902 = vld [vmem:[#allocation2 + $0x20] sm:$0xff]
        %v903 = vld [vmem:[#allocation2 + $0x28] sm:$0xff]
        %v904 = vld [vmem:[#allocation2 + $0x30] sm:$0xff]
        %v905 = vld [vmem:[#allocation2 + $0x38] sm:$0xff]
        %v906 = vld [vmem:[#allocation2 + $0x40] sm:$0xff]
        %v907 = vld [vmem:[#allocation2 + $0x6] sm:$0xff]
        %v908 = vld [vmem:[#allocation2 + $0xe] sm:$0xff]
        %v909 = vld [vmem:[#allocation2 + $0x16] sm:$0xff]
        %v910 = vld [vmem:[#allocation2 + $0x1e] sm:$0xff]
        %v911 = vld [vmem:[#allocation2 + $0x26] sm:$0xff]
        %v912 = vld [vmem:[#allocation2 + $0x2e] sm:$0xff]
        %v913 = vld [vmem:[#allocation2 + $0x36] sm:$0xff]
        %v914 = vld [vmem:[#allocation2 + $0x3e] sm:$0xff]
        %v916 = vsel %vm240, %v899, 0
        %v919 = vsel %vm240, %v900, 0
        %v922 = vsel %vm240, %v901, 0
        %v925 = vsel %vm240, %v902, 0
        %v928 = vsel %vm240, %v903, 0
        %v931 = vsel %vm240, %v904, 0
        %v934 = vsel %vm240, %v905, 0
        %v937 = vsel %vm240, %v906, 0
        %939 = vmatprep.subr.mxu0 0.0
        %940 = vmatpush1.msra.mxu0 0.0
        %941 = vmatprep.subr.mxu0 0.0
        %942 = vmatpush1.msra.mxu0 0.0
        %943 = vmatprep.subr.mxu0 0.0
        %944 = vmatpush1.msra.mxu0 0.0
        %945 = vmatprep.subr.mxu0 0.0
        %946 = vmatpush1.msra.mxu0 0.0
        %947 = vmatprep.subr.mxu0 0.0
        %948 = vmatpush1.msra.mxu0 0.0
        %949 = vmatprep.subr.mxu0 0.0
        %950 = vmatpush1.msra.mxu0 0.0
        %951 = vmatprep.subr.mxu0 0.0
        %952 = vmatpush1.msra.mxu0 0.0
        %953 = vmatprep.subr.mxu0 0.0
        %954 = vmatpush1.msra.mxu0 0.0
        %955 = vmatprep.subr.mxu0 0.0
        %956 = vmatpush1.msra.mxu0 0.0
        %957 = vmatprep.subr.mxu0 0.0
        %958 = vmatpush1.msra.mxu0 0.0
        %959 = vmatprep.subr.mxu0 0.0
        %960 = vmatpush1.msra.mxu0 0.0
        %961 = vmatprep.subr.mxu0 0.0
        %962 = vmatpush1.msra.mxu0 0.0
        %963 = vmatprep.subr.mxu0 0.0
        %964 = vmatpush1.msra.mxu0 %v894
        %965 = vmatprep.subr.mxu0 0.0
        %966 = vmatpush1.msra.mxu0 %v893
        %967 = vmatprep.subr.mxu0 0.0
        %968 = vmatpush1.msra.mxu0 %v892
        %969 = vmatprep.subr.mxu0 0.0
        %970 = vmatpush1.msra.mxu0 %v891
        %971 = vmatprep.subr.mxu0 0.0
        %972 = vmatpush2.msra.mxu0 0.0
        %973 = vmatprep.subr.mxu0 0.0
        %974 = vmatpush2.msra.mxu0 0.0
        %975 = vmatprep.subr.mxu0 0.0
        %976 = vmatpush2.msra.mxu0 0.0
        %977 = vmatprep.subr.mxu0 0.0
        %978 = vmatpush2.msra.mxu0 0.0
        %979 = vmatprep.subr.mxu0 0.0
        %980 = vmatpush2.msra.mxu0 0.0
        %981 = vmatprep.subr.mxu0 0.0
        %982 = vmatpush2.msra.mxu0 0.0
        %983 = vmatprep.subr.mxu0 0.0
        %984 = vmatpush2.msra.mxu0 0.0
        %985 = vmatprep.subr.mxu0 0.0
        %986 = vmatpush2.msra.mxu0 0.0
        %987 = vmatprep.subr.mxu0 0.0
        %988 = vmatpush2.msra.mxu0 0.0
        %989 = vmatprep.subr.mxu0 0.0
        %990 = vmatpush2.msra.mxu0 0.0
        %991 = vmatprep.subr.mxu0 0.0
        %992 = vmatpush2.msra.mxu0 0.0
        %993 = vmatprep.subr.mxu0 0.0
        %994 = vmatpush2.msra.mxu0 0.0
        %995 = vmatprep.subr.mxu0 0.0
        %996 = vmatpush2.msra.mxu0 0.0
        %997 = vmatprep.subr.mxu0 0.0
        %998 = vmatpush2.msra.mxu0 0.0
        %999 = vmatprep.subr.mxu0 0.0
        %1000 = vmatpush2.msra.mxu0 0.0
        %1001 = vmatprep.subr.mxu0 0.0
        %1002 = vmatpush2.msra.mxu0 0.0
        %1003 = vmatprep.mubr.f32.mxu0 0.0
        %1004 = vmatmul.mubr.f32.gmra.mxu0 %v916
        %v1005 = vpop.f32.mrf.mxu0
        %v1006 = vadd.f32 0.0, %v1005
        %v1007 = vpop.f32.mrf.mxu0
        %1008 = vmatprep.mubr.f32.mxu0 0.0
        %1009 = vmatmul.mubr.f32.gmra.mxu0 %v919
        %v1010 = vpop.f32.mrf.mxu0
        %v1011 = vadd.f32 0.0, %v1010
        %v1012 = vpop.f32.mrf.mxu0
        %1013 = vmatprep.mubr.f32.mxu0 0.0
        %1014 = vmatmul.mubr.f32.gmra.mxu0 %v922
        %v1015 = vpop.f32.mrf.mxu0
        %v1016 = vadd.f32 0.0, %v1015
        %v1017 = vpop.f32.mrf.mxu0
        %1018 = vmatprep.mubr.f32.mxu0 0.0
        %1019 = vmatmul.mubr.f32.gmra.mxu0 %v925
        %v1020 = vpop.f32.mrf.mxu0
        %v1021 = vadd.f32 0.0, %v1020
        %v1022 = vpop.f32.mrf.mxu0
        %1023 = vmatprep.mubr.f32.mxu0 0.0
        %1024 = vmatmul.mubr.f32.gmra.mxu0 %v928
        %v1025 = vpop.f32.mrf.mxu0
        %v1026 = vadd.f32 0.0, %v1025
        %v1027 = vpop.f32.mrf.mxu0
        %1028 = vmatprep.mubr.f32.mxu0 0.0
        %1029 = vmatmul.mubr.f32.gmra.mxu0 %v931
        %v1030 = vpop.f32.mrf.mxu0
        %v1031 = vadd.f32 0.0, %v1030
        %v1032 = vpop.f32.mrf.mxu0
        %1033 = vmatprep.mubr.f32.mxu0 0.0
        %1034 = vmatmul.mubr.f32.gmra.mxu0 %v934
        %v1035 = vpop.f32.mrf.mxu0
        %v1036 = vadd.f32 0.0, %v1035
        %v1037 = vpop.f32.mrf.mxu0
        %1038 = vmatprep.mubr.f32.mxu0 0.0
        %1039 = vmatmul.mubr.f32.gmra.mxu0 %v937
        %v1040 = vpop.f32.mrf.mxu0
        %v1041 = vadd.f32 0.0, %v1040
        %v1042 = vpop.f32.mrf.mxu0
        %1043 = vdwg.mxu0
        %v1045 = vsel %vm240, %v907, 0
        %v1048 = vsel %vm240, %v908, 0
        %v1051 = vsel %vm240, %v909, 0
        %v1054 = vsel %vm240, %v910, 0
        %v1057 = vsel %vm240, %v911, 0
        %v1060 = vsel %vm240, %v912, 0
        %v1063 = vsel %vm240, %v913, 0
        %v1066 = vsel %vm240, %v914, 0
        %1068 = vmatprep.subr.mxu0 0.0
        %1069 = vmatpush1.msra.mxu0 0.0
        %1070 = vmatprep.subr.mxu0 0.0
        %1071 = vmatpush1.msra.mxu0 0.0
        %1072 = vmatprep.subr.mxu0 0.0
        %1073 = vmatpush1.msra.mxu0 0.0
        %1074 = vmatprep.subr.mxu0 0.0
        %1075 = vmatpush1.msra.mxu0 0.0
        %1076 = vmatprep.subr.mxu0 0.0
        %1077 = vmatpush1.msra.mxu0 0.0
        %1078 = vmatprep.subr.mxu0 0.0
        %1079 = vmatpush1.msra.mxu0 0.0
        %1080 = vmatprep.subr.mxu0 0.0
        %1081 = vmatpush1.msra.mxu0 0.0
        %1082 = vmatprep.subr.mxu0 0.0
        %1083 = vmatpush1.msra.mxu0 0.0
        %1084 = vmatprep.subr.mxu0 0.0
        %1085 = vmatpush1.msra.mxu0 0.0
        %1086 = vmatprep.subr.mxu0 0.0
        %1087 = vmatpush1.msra.mxu0 0.0
        %1088 = vmatprep.subr.mxu0 0.0
        %1089 = vmatpush1.msra.mxu0 0.0
        %1090 = vmatprep.subr.mxu0 0.0
        %1091 = vmatpush1.msra.mxu0 0.0
        %1092 = vmatprep.subr.mxu0 0.0
        %1093 = vmatpush1.msra.mxu0 %v890
        %1094 = vmatprep.subr.mxu0 0.0
        %1095 = vmatpush1.msra.mxu0 %v889
        %1096 = vmatprep.subr.mxu0 0.0
        %1097 = vmatpush1.msra.mxu0 %v888
        %1098 = vmatprep.subr.mxu0 0.0
        %1099 = vmatpush1.msra.mxu0 %v887
        %1100 = vmatprep.subr.mxu0 0.0
        %1101 = vmatpush2.msra.mxu0 0.0
        %1102 = vmatprep.subr.mxu0 0.0
        %1103 = vmatpush2.msra.mxu0 0.0
        %1104 = vmatprep.subr.mxu0 0.0
        %1105 = vmatpush2.msra.mxu0 0.0
        %1106 = vmatprep.subr.mxu0 0.0
        %1107 = vmatpush2.msra.mxu0 0.0
        %1108 = vmatprep.subr.mxu0 0.0
        %1109 = vmatpush2.msra.mxu0 0.0
        %1110 = vmatprep.subr.mxu0 0.0
        %1111 = vmatpush2.msra.mxu0 0.0
        %1112 = vmatprep.subr.mxu0 0.0
        %1113 = vmatpush2.msra.mxu0 0.0
        %1114 = vmatprep.subr.mxu0 0.0
        %1115 = vmatpush2.msra.mxu0 0.0
        %1116 = vmatprep.subr.mxu0 0.0
        %1117 = vmatpush2.msra.mxu0 0.0
        %1118 = vmatprep.subr.mxu0 0.0
        %1119 = vmatpush2.msra.mxu0 0.0
        %1120 = vmatprep.subr.mxu0 0.0
        %1121 = vmatpush2.msra.mxu0 0.0
        %1122 = vmatprep.subr.mxu0 0.0
        %1123 = vmatpush2.msra.mxu0 0.0
        %1124 = vmatprep.subr.mxu0 0.0
        %1125 = vmatpush2.msra.mxu0 0.0
        %1126 = vmatprep.subr.mxu0 0.0
        %1127 = vmatpush2.msra.mxu0 0.0
        %1128 = vmatprep.subr.mxu0 0.0
        %1129 = vmatpush2.msra.mxu0 0.0
        %1130 = vmatprep.subr.mxu0 0.0
        %1131 = vmatpush2.msra.mxu0 0.0
        %1132 = vmatprep.mubr.f32.mxu0 0.0
        %1133 = vmatmul.mubr.f32.gmra.mxu0 %v1045
        %v1134 = vpop.f32.mrf.mxu0
        %v1135 = vadd.f32 %v1006, %v1134
        %v1136 = vpop.f32.mrf.mxu0
        %1137 = vmatprep.mubr.f32.mxu0 0.0
        %1138 = vmatmul.mubr.f32.gmra.mxu0 %v1048
        %v1139 = vpop.f32.mrf.mxu0
        %v1140 = vadd.f32 %v1011, %v1139
        %v1141 = vpop.f32.mrf.mxu0
        %1142 = vmatprep.mubr.f32.mxu0 0.0
        %1143 = vmatmul.mubr.f32.gmra.mxu0 %v1051
        %v1144 = vpop.f32.mrf.mxu0
        %v1145 = vadd.f32 %v1016, %v1144
        %v1146 = vpop.f32.mrf.mxu0
        %1147 = vmatprep.mubr.f32.mxu0 0.0
        %1148 = vmatmul.mubr.f32.gmra.mxu0 %v1054
        %v1149 = vpop.f32.mrf.mxu0
        %v1150 = vadd.f32 %v1021, %v1149
        %v1151 = vpop.f32.mrf.mxu0
        %1152 = vmatprep.mubr.f32.mxu0 0.0
        %1153 = vmatmul.mubr.f32.gmra.mxu0 %v1057
        %v1154 = vpop.f32.mrf.mxu0
        %v1155 = vadd.f32 %v1026, %v1154
        %v1156 = vpop.f32.mrf.mxu0
        %1157 = vmatprep.mubr.f32.mxu0 0.0
        %1158 = vmatmul.mubr.f32.gmra.mxu0 %v1060
        %v1159 = vpop.f32.mrf.mxu0
        %v1160 = vadd.f32 %v1031, %v1159
        %v1161 = vpop.f32.mrf.mxu0
        %1162 = vmatprep.mubr.f32.mxu0 0.0
        %1163 = vmatmul.mubr.f32.gmra.mxu0 %v1063
        %v1164 = vpop.f32.mrf.mxu0
        %v1165 = vadd.f32 %v1036, %v1164
        %v1166 = vpop.f32.mrf.mxu0
        %1167 = vmatprep.mubr.f32.mxu0 0.0
        %1168 = vmatmul.mubr.f32.gmra.mxu0 %v1066
        %v1169 = vpop.f32.mrf.mxu0
        %v1170 = vadd.f32 %v1041, %v1169
        %v1171 = vpop.f32.mrf.mxu0
        %1172 = vdwg.mxu0
        %v1173 = vld [vmem:[#allocation2 + $0xa] sm:$0xff]
        %v1174 = vld [vmem:[#allocation2 + $0x12] sm:$0xff]
        %v1175 = vld [vmem:[#allocation2 + $0x1a] sm:$0xff]
        %v1176 = vld [vmem:[#allocation2 + $0x22] sm:$0xff]
        %v1177 = vld [vmem:[#allocation2 + $0x2a] sm:$0xff]
        %v1178 = vld [vmem:[#allocation2 + $0x32] sm:$0xff]
        %v1179 = vld [vmem:[#allocation2 + $0x3a] sm:$0xff]
        %v1180 = vld [vmem:[#allocation2 + $0x42] sm:$0xff]
        %v1182 = vsel %vm240, %v1173, 0
        %v1185 = vsel %vm240, %v1174, 0
        %v1188 = vsel %vm240, %v1175, 0
        %v1191 = vsel %vm240, %v1176, 0
        %v1194 = vsel %vm240, %v1177, 0
        %v1197 = vsel %vm240, %v1178, 0
        %v1200 = vsel %vm240, %v1179, 0
        %v1203 = vsel %vm240, %v1180, 0
        %1205 = vmatprep.subr.mxu0 0.0
        %1206 = vmatpush1.msra.mxu0 0.0
        %1207 = vmatprep.subr.mxu0 0.0
        %1208 = vmatpush1.msra.mxu0 0.0
        %1209 = vmatprep.subr.mxu0 0.0
        %1210 = vmatpush1.msra.mxu0 0.0
        %1211 = vmatprep.subr.mxu0 0.0
        %1212 = vmatpush1.msra.mxu0 0.0
        %1213 = vmatprep.subr.mxu0 0.0
        %1214 = vmatpush1.msra.mxu0 0.0
        %1215 = vmatprep.subr.mxu0 0.0
        %1216 = vmatpush1.msra.mxu0 0.0
        %1217 = vmatprep.subr.mxu0 0.0
        %1218 = vmatpush1.msra.mxu0 0.0
        %1219 = vmatprep.subr.mxu0 0.0
        %1220 = vmatpush1.msra.mxu0 0.0
        %1221 = vmatprep.subr.mxu0 0.0
        %1222 = vmatpush1.msra.mxu0 0.0
        %1223 = vmatprep.subr.mxu0 0.0
        %1224 = vmatpush1.msra.mxu0 0.0
        %1225 = vmatprep.subr.mxu0 0.0
        %1226 = vmatpush1.msra.mxu0 0.0
        %1227 = vmatprep.subr.mxu0 0.0
        %1228 = vmatpush1.msra.mxu0 0.0
        %1229 = vmatprep.subr.mxu0 0.0
        %1230 = vmatpush1.msra.mxu0 %v898
        %1231 = vmatprep.subr.mxu0 0.0
        %1232 = vmatpush1.msra.mxu0 %v897
        %1233 = vmatprep.subr.mxu0 0.0
        %1234 = vmatpush1.msra.mxu0 %v896
        %1235 = vmatprep.subr.mxu0 0.0
        %1236 = vmatpush1.msra.mxu0 %v895
        %1237 = vmatprep.subr.mxu0 0.0
        %1238 = vmatpush2.msra.mxu0 0.0
        %1239 = vmatprep.subr.mxu0 0.0
        %1240 = vmatpush2.msra.mxu0 0.0
        %1241 = vmatprep.subr.mxu0 0.0
        %1242 = vmatpush2.msra.mxu0 0.0
        %1243 = vmatprep.subr.mxu0 0.0
        %1244 = vmatpush2.msra.mxu0 0.0
        %1245 = vmatprep.subr.mxu0 0.0
        %1246 = vmatpush2.msra.mxu0 0.0
        %1247 = vmatprep.subr.mxu0 0.0
        %1248 = vmatpush2.msra.mxu0 0.0
        %1249 = vmatprep.subr.mxu0 0.0
        %1250 = vmatpush2.msra.mxu0 0.0
        %1251 = vmatprep.subr.mxu0 0.0
        %1252 = vmatpush2.msra.mxu0 0.0
        %1253 = vmatprep.subr.mxu0 0.0
        %1254 = vmatpush2.msra.mxu0 0.0
        %1255 = vmatprep.subr.mxu0 0.0
        %1256 = vmatpush2.msra.mxu0 0.0
        %1257 = vmatprep.subr.mxu0 0.0
        %1258 = vmatpush2.msra.mxu0 0.0
        %1259 = vmatprep.subr.mxu0 0.0
        %1260 = vmatpush2.msra.mxu0 0.0
        %1261 = vmatprep.subr.mxu0 0.0
        %1262 = vmatpush2.msra.mxu0 0.0
        %1263 = vmatprep.subr.mxu0 0.0
        %1264 = vmatpush2.msra.mxu0 0.0
        %1265 = vmatprep.subr.mxu0 0.0
        %1266 = vmatpush2.msra.mxu0 0.0
        %1267 = vmatprep.subr.mxu0 0.0
        %1268 = vmatpush2.msra.mxu0 0.0
        %1269 = vmatprep.mubr.f32.mxu0 0.0
        %1270 = vmatmul.mubr.f32.gmra.mxu0 %v1182
        %v1271 = vpop.f32.mrf.mxu0
        %v1272 = vadd.f32 0.0, %v1271
        %v1273 = vpop.f32.mrf.mxu0
        %1274 = vmatprep.mubr.f32.mxu0 0.0
        %1275 = vmatmul.mubr.f32.gmra.mxu0 %v1185
        %v1276 = vpop.f32.mrf.mxu0
        %v1277 = vadd.f32 0.0, %v1276
        %v1278 = vpop.f32.mrf.mxu0
        %1279 = vmatprep.mubr.f32.mxu0 0.0
        %1280 = vmatmul.mubr.f32.gmra.mxu0 %v1188
        %v1281 = vpop.f32.mrf.mxu0
        %v1282 = vadd.f32 0.0, %v1281
        %v1283 = vpop.f32.mrf.mxu0
        %1284 = vmatprep.mubr.f32.mxu0 0.0
        %1285 = vmatmul.mubr.f32.gmra.mxu0 %v1191
        %v1286 = vpop.f32.mrf.mxu0
        %v1287 = vadd.f32 0.0, %v1286
        %v1288 = vpop.f32.mrf.mxu0
        %1289 = vmatprep.mubr.f32.mxu0 0.0
        %1290 = vmatmul.mubr.f32.gmra.mxu0 %v1194
        %v1291 = vpop.f32.mrf.mxu0
        %v1292 = vadd.f32 0.0, %v1291
        %v1293 = vpop.f32.mrf.mxu0
        %1294 = vmatprep.mubr.f32.mxu0 0.0
        %1295 = vmatmul.mubr.f32.gmra.mxu0 %v1197
        %v1296 = vpop.f32.mrf.mxu0
        %v1297 = vadd.f32 0.0, %v1296
        %v1298 = vpop.f32.mrf.mxu0
        %1299 = vmatprep.mubr.f32.mxu0 0.0
        %1300 = vmatmul.mubr.f32.gmra.mxu0 %v1200
        %v1301 = vpop.f32.mrf.mxu0
        %v1302 = vadd.f32 0.0, %v1301
        %v1303 = vpop.f32.mrf.mxu0
        %1304 = vmatprep.mubr.f32.mxu0 0.0
        %1305 = vmatmul.mubr.f32.gmra.mxu0 %v1203
        %v1306 = vpop.f32.mrf.mxu0
        %v1307 = vadd.f32 0.0, %v1306
        %v1308 = vpop.f32.mrf.mxu0
        %1309 = vdwg.mxu0
        %v1310 = vadd.f32 %v1135, %v1272
        %v1311 = vadd.f32 %v1140, %v1277
        %v1312 = vadd.f32 %v1145, %v1282
        %v1313 = vadd.f32 %v1150, %v1287
        %v1314 = vadd.f32 %v1155, %v1292
        %v1315 = vadd.f32 %v1160, %v1297
        %v1316 = vadd.f32 %v1165, %v1302
        %v1317 = vadd.f32 %v1170, %v1307
        %s1318 = scalar_lea.vmem %s2, 1
        %v1319 = vld [vmem:[%s1318] sm:$0x1]
        %v1321 = vlaneseq
        %v1322 = vshrl.u32 %v1321, 7
        %v1323 = vsub.s32 0, %v1322
        %v1324 = vrot.slane %v1319, %v1323
        %v1326 = vadd.f32 %v1310, %v1324
        %v1327 = vadd.f32 %v1311, %v1324
        %v1328 = vadd.f32 %v1312, %v1324
        %v1329 = vadd.f32 %v1313, %v1324
        %v1330 = vadd.f32 %v1314, %v1324
        %v1331 = vadd.f32 %v1315, %v1324
        %v1332 = vadd.f32 %v1316, %v1324
        %v1333 = vadd.f32 %v1317, %v1324
        %v1334 = vmax.f32 %v1326, 0.0
        %v1335 = vmax.f32 %v1327, 0.0
        %v1336 = vmax.f32 %v1328, 0.0
        %v1337 = vmax.f32 %v1329, 0.0
        %v1338 = vmax.f32 %v1330, 0.0
        %v1339 = vmax.f32 %v1331, 0.0
        %v1340 = vmax.f32 %v1332, 0.0
        %v1341 = vmax.f32 %v1333, 0.0
        %s1342 = scalar_lea.vmem %s3, 32
        %v1343 = vld [vmem:[%s1342] sm:$0xff]
        %v1344 = vld [vmem:[%s1342 + $0x8] sm:$0xff]
        %v1345 = vld [vmem:[%s1342 + $0x10] sm:$0xff]
        %v1346 = vld [vmem:[%s1342 + $0x18] sm:$0xff]
        %s1347 = scalar_lea.vmem %s4, 1
        %v1348 = vld [vmem:[%s1347] sm:$0x1]
        %v1350 = vlaneseq
        %v1351 = vshrl.u32 %v1350, 7
        %v1352 = vsub.s32 0, %v1351
        %v1353 = vrot.slane %v1348, %v1352
        %v1356 = vsel %vm240, %v1334, 0
        %v1359 = vsel %vm240, %v1335, 0
        %v1362 = vsel %vm240, %v1336, 0
        %v1365 = vsel %vm240, %v1337, 0
        %v1368 = vsel %vm240, %v1338, 0
        %v1371 = vsel %vm240, %v1339, 0
        %v1374 = vsel %vm240, %v1340, 0
        %v1377 = vsel %vm240, %v1341, 0
        %1379 = vmatprep.subr.mxu0 0.0
        %1380 = vmatpush1.msra.mxu0 0.0
        %1381 = vmatprep.subr.mxu0 0.0
        %1382 = vmatpush1.msra.mxu0 0.0
        %1383 = vmatprep.subr.mxu0 0.0
        %1384 = vmatpush1.msra.mxu0 0.0
        %1385 = vmatprep.subr.mxu0 0.0
        %1386 = vmatpush1.msra.mxu0 0.0
        %1387 = vmatprep.subr.mxu0 0.0
        %1388 = vmatpush1.msra.mxu0 0.0
        %1389 = vmatprep.subr.mxu0 0.0
        %1390 = vmatpush1.msra.mxu0 0.0
        %1391 = vmatprep.subr.mxu0 0.0
        %1392 = vmatpush1.msra.mxu0 0.0
        %1393 = vmatprep.subr.mxu0 0.0
        %1394 = vmatpush1.msra.mxu0 0.0
        %1395 = vmatprep.subr.mxu0 0.0
        %1396 = vmatpush1.msra.mxu0 0.0
        %1397 = vmatprep.subr.mxu0 0.0
        %1398 = vmatpush1.msra.mxu0 0.0
        %1399 = vmatprep.subr.mxu0 0.0
        %1400 = vmatpush1.msra.mxu0 0.0
        %1401 = vmatprep.subr.mxu0 0.0
        %1402 = vmatpush1.msra.mxu0 0.0
        %1403 = vmatprep.subr.mxu0 0.0
        %1404 = vmatpush1.msra.mxu0 %v1346
        %1405 = vmatprep.subr.mxu0 0.0
        %1406 = vmatpush1.msra.mxu0 %v1345
        %1407 = vmatprep.subr.mxu0 0.0
        %1408 = vmatpush1.msra.mxu0 %v1344
        %1409 = vmatprep.subr.mxu0 0.0
        %1410 = vmatpush1.msra.mxu0 %v1343
        %1411 = vmatprep.subr.mxu0 0.0
        %1412 = vmatpush2.msra.mxu0 0.0
        %1413 = vmatprep.subr.mxu0 0.0
        %1414 = vmatpush2.msra.mxu0 0.0
        %1415 = vmatprep.subr.mxu0 0.0
        %1416 = vmatpush2.msra.mxu0 0.0
        %1417 = vmatprep.subr.mxu0 0.0
        %1418 = vmatpush2.msra.mxu0 0.0
        %1419 = vmatprep.subr.mxu0 0.0
        %1420 = vmatpush2.msra.mxu0 0.0
        %1421 = vmatprep.subr.mxu0 0.0
        %1422 = vmatpush2.msra.mxu0 0.0
        %1423 = vmatprep.subr.mxu0 0.0
        %1424 = vmatpush2.msra.mxu0 0.0
        %1425 = vmatprep.subr.mxu0 0.0
        %1426 = vmatpush2.msra.mxu0 0.0
        %1427 = vmatprep.subr.mxu0 0.0
        %1428 = vmatpush2.msra.mxu0 0.0
        %1429 = vmatprep.subr.mxu0 0.0
        %1430 = vmatpush2.msra.mxu0 0.0
        %1431 = vmatprep.subr.mxu0 0.0
        %1432 = vmatpush2.msra.mxu0 0.0
        %1433 = vmatprep.subr.mxu0 0.0
        %1434 = vmatpush2.msra.mxu0 0.0
        %1435 = vmatprep.subr.mxu0 0.0
        %1436 = vmatpush2.msra.mxu0 0.0
        %1437 = vmatprep.subr.mxu0 0.0
        %1438 = vmatpush2.msra.mxu0 0.0
        %1439 = vmatprep.subr.mxu0 0.0
        %1440 = vmatpush2.msra.mxu0 0.0
        %1441 = vmatprep.subr.mxu0 0.0
        %1442 = vmatpush2.msra.mxu0 0.0
        %1443 = vmatprep.mubr.f32.mxu0 0.0
        %1444 = vmatmul.mubr.f32.gmra.mxu0 %v1356
        %v1445 = vpop.f32.mrf.mxu0
        %v1446 = vadd.f32 %v1353, %v1445
        %v1447 = vpop.f32.mrf.mxu0
        %1448 = vmatprep.mubr.f32.mxu0 0.0
        %1449 = vmatmul.mubr.f32.gmra.mxu0 %v1359
        %v1450 = vpop.f32.mrf.mxu0
        %v1451 = vadd.f32 %v1353, %v1450
        %v1452 = vpop.f32.mrf.mxu0
        %1453 = vmatprep.mubr.f32.mxu0 0.0
        %1454 = vmatmul.mubr.f32.gmra.mxu0 %v1362
        %v1455 = vpop.f32.mrf.mxu0
        %v1456 = vadd.f32 %v1353, %v1455
        %v1457 = vpop.f32.mrf.mxu0
        %1458 = vmatprep.mubr.f32.mxu0 0.0
        %1459 = vmatmul.mubr.f32.gmra.mxu0 %v1365
        %v1460 = vpop.f32.mrf.mxu0
        %v1461 = vadd.f32 %v1353, %v1460
        %v1462 = vpop.f32.mrf.mxu0
        %1463 = vmatprep.mubr.f32.mxu0 0.0
        %1464 = vmatmul.mubr.f32.gmra.mxu0 %v1368
        %v1465 = vpop.f32.mrf.mxu0
        %v1466 = vadd.f32 %v1353, %v1465
        %v1467 = vpop.f32.mrf.mxu0
        %1468 = vmatprep.mubr.f32.mxu0 0.0
        %1469 = vmatmul.mubr.f32.gmra.mxu0 %v1371
        %v1470 = vpop.f32.mrf.mxu0
        %v1471 = vadd.f32 %v1353, %v1470
        %v1472 = vpop.f32.mrf.mxu0
        %1473 = vmatprep.mubr.f32.mxu0 0.0
        %1474 = vmatmul.mubr.f32.gmra.mxu0 %v1374
        %v1475 = vpop.f32.mrf.mxu0
        %v1476 = vadd.f32 %v1353, %v1475
        %v1477 = vpop.f32.mrf.mxu0
        %1478 = vmatprep.mubr.f32.mxu0 0.0
        %1479 = vmatmul.mubr.f32.gmra.mxu0 %v1377
        %v1480 = vpop.f32.mrf.mxu0
        %v1481 = vadd.f32 %v1353, %v1480
        %v1482 = vpop.f32.mrf.mxu0
        %1483 = vdwg.mxu0
        %v1484 = vmax.f32 %v1446, 0.0
        %v1485 = vmax.f32 %v1451, 0.0
        %v1486 = vmax.f32 %v1456, 0.0
        %v1487 = vmax.f32 %v1461, 0.0
        %v1488 = vmax.f32 %v1466, 0.0
        %v1489 = vmax.f32 %v1471, 0.0
        %v1490 = vmax.f32 %v1476, 0.0
        %v1491 = vmax.f32 %v1481, 0.0
        %v1492 = vadd.f32 %v899, %v1484
        %v1493 = vadd.f32 %v900, %v1485
        %v1494 = vadd.f32 %v901, %v1486
        %v1495 = vadd.f32 %v902, %v1487
        %v1496 = vadd.f32 %v903, %v1488
        %v1497 = vadd.f32 %v904, %v1489
        %v1498 = vadd.f32 %v905, %v1490
        %v1499 = vadd.f32 %v906, %v1491
        %1500 = vst.msk [vmem:[#allocation2 + $0x8] sm:$0xff] %vm240, %v1492
        %1501 = vst.msk [vmem:[#allocation2 + $0x10] sm:$0xff] %vm240, %v1493
        %1502 = vst.msk [vmem:[#allocation2 + $0x18] sm:$0xff] %vm240, %v1494
        %1503 = vst.msk [vmem:[#allocation2 + $0x20] sm:$0xff] %vm240, %v1495
        %1504 = vst.msk [vmem:[#allocation2 + $0x28] sm:$0xff] %vm240, %v1496
        %1505 = vst.msk [vmem:[#allocation2 + $0x30] sm:$0xff] %vm240, %v1497
        %1506 = vst.msk [vmem:[#allocation2 + $0x38] sm:$0xff] %vm240, %v1498
        %1507 = vst.msk [vmem:[#allocation2 + $0x40] sm:$0xff] %vm240, %v1499
        %s1508 = scalar_lea.vmem [#allocation3], 192
        %v1509 = vld [vmem:[%s1508] sm:$0xff]
        %v1510 = vld [vmem:[%s1508 + $0x8] sm:$0xff]
        %v1511 = vld [vmem:[%s1508 + $0x10] sm:$0xff]
        %v1512 = vld [vmem:[%s1508 + $0x18] sm:$0xff]
        %v1513 = vld [vmem:[%s1508 + $0x20] sm:$0xff]
        %v1514 = vld [vmem:[%s1508 + $0x28] sm:$0xff]
        %v1515 = vld [vmem:[%s1508 + $0x30] sm:$0xff]
        %v1516 = vld [vmem:[%s1508 + $0x38] sm:$0xff]
        %v1517 = vld [vmem:[%s1508 + $0x40] sm:$0xff]
        %v1518 = vld [vmem:[%s1508 + $0x48] sm:$0xff]
        %v1519 = vld [vmem:[%s1508 + $0x50] sm:$0xff]
        %v1520 = vld [vmem:[%s1508 + $0x58] sm:$0xff]
        %v1521 = vld [vmem:[#allocation2 + $0x8] sm:$0xff]
        %v1522 = vld [vmem:[#allocation2 + $0x10] sm:$0xff]
        %v1523 = vld [vmem:[#allocation2 + $0x18] sm:$0xff]
        %v1524 = vld [vmem:[#allocation2 + $0x20] sm:$0xff]
        %v1525 = vld [vmem:[#allocation2 + $0x28] sm:$0xff]
        %v1526 = vld [vmem:[#allocation2 + $0x30] sm:$0xff]
        %v1527 = vld [vmem:[#allocation2 + $0x38] sm:$0xff]
        %v1528 = vld [vmem:[#allocation2 + $0x40] sm:$0xff]
        %v1529 = vld [vmem:[#allocation2 + $0x4] sm:$0xff]
        %v1530 = vld [vmem:[#allocation2 + $0xc] sm:$0xff]
        %v1531 = vld [vmem:[#allocation2 + $0x14] sm:$0xff]
        %v1532 = vld [vmem:[#allocation2 + $0x1c] sm:$0xff]
        %v1533 = vld [vmem:[#allocation2 + $0x24] sm:$0xff]
        %v1534 = vld [vmem:[#allocation2 + $0x2c] sm:$0xff]
        %v1535 = vld [vmem:[#allocation2 + $0x34] sm:$0xff]
        %v1536 = vld [vmem:[#allocation2 + $0x3c] sm:$0xff]
        %v1538 = vsel %vm240, %v1521, 0
        %v1541 = vsel %vm240, %v1522, 0
        %v1544 = vsel %vm240, %v1523, 0
        %v1547 = vsel %vm240, %v1524, 0
        %v1550 = vsel %vm240, %v1525, 0
        %v1553 = vsel %vm240, %v1526, 0
        %v1556 = vsel %vm240, %v1527, 0
        %v1559 = vsel %vm240, %v1528, 0
        %1561 = vmatprep.subr.mxu0 0.0
        %1562 = vmatpush1.msra.mxu0 0.0
        %1563 = vmatprep.subr.mxu0 0.0
        %1564 = vmatpush1.msra.mxu0 0.0
        %1565 = vmatprep.subr.mxu0 0.0
        %1566 = vmatpush1.msra.mxu0 0.0
        %1567 = vmatprep.subr.mxu0 0.0
        %1568 = vmatpush1.msra.mxu0 0.0
        %1569 = vmatprep.subr.mxu0 0.0
        %1570 = vmatpush1.msra.mxu0 0.0
        %1571 = vmatprep.subr.mxu0 0.0
        %1572 = vmatpush1.msra.mxu0 0.0
        %1573 = vmatprep.subr.mxu0 0.0
        %1574 = vmatpush1.msra.mxu0 0.0
        %1575 = vmatprep.subr.mxu0 0.0
        %1576 = vmatpush1.msra.mxu0 0.0
        %1577 = vmatprep.subr.mxu0 0.0
        %1578 = vmatpush1.msra.mxu0 0.0
        %1579 = vmatprep.subr.mxu0 0.0
        %1580 = vmatpush1.msra.mxu0 0.0
        %1581 = vmatprep.subr.mxu0 0.0
        %1582 = vmatpush1.msra.mxu0 0.0
        %1583 = vmatprep.subr.mxu0 0.0
        %1584 = vmatpush1.msra.mxu0 0.0
        %1585 = vmatprep.subr.mxu0 0.0
        %1586 = vmatpush1.msra.mxu0 %v1516
        %1587 = vmatprep.subr.mxu0 0.0
        %1588 = vmatpush1.msra.mxu0 %v1515
        %1589 = vmatprep.subr.mxu0 0.0
        %1590 = vmatpush1.msra.mxu0 %v1514
        %1591 = vmatprep.subr.mxu0 0.0
        %1592 = vmatpush1.msra.mxu0 %v1513
        %1593 = vmatprep.subr.mxu0 0.0
        %1594 = vmatpush2.msra.mxu0 0.0
        %1595 = vmatprep.subr.mxu0 0.0
        %1596 = vmatpush2.msra.mxu0 0.0
        %1597 = vmatprep.subr.mxu0 0.0
        %1598 = vmatpush2.msra.mxu0 0.0
        %1599 = vmatprep.subr.mxu0 0.0
        %1600 = vmatpush2.msra.mxu0 0.0
        %1601 = vmatprep.subr.mxu0 0.0
        %1602 = vmatpush2.msra.mxu0 0.0
        %1603 = vmatprep.subr.mxu0 0.0
        %1604 = vmatpush2.msra.mxu0 0.0
        %1605 = vmatprep.subr.mxu0 0.0
        %1606 = vmatpush2.msra.mxu0 0.0
        %1607 = vmatprep.subr.mxu0 0.0
        %1608 = vmatpush2.msra.mxu0 0.0
        %1609 = vmatprep.subr.mxu0 0.0
        %1610 = vmatpush2.msra.mxu0 0.0
        %1611 = vmatprep.subr.mxu0 0.0
        %1612 = vmatpush2.msra.mxu0 0.0
        %1613 = vmatprep.subr.mxu0 0.0
        %1614 = vmatpush2.msra.mxu0 0.0
        %1615 = vmatprep.subr.mxu0 0.0
        %1616 = vmatpush2.msra.mxu0 0.0
        %1617 = vmatprep.subr.mxu0 0.0
        %1618 = vmatpush2.msra.mxu0 0.0
        %1619 = vmatprep.subr.mxu0 0.0
        %1620 = vmatpush2.msra.mxu0 0.0
        %1621 = vmatprep.subr.mxu0 0.0
        %1622 = vmatpush2.msra.mxu0 0.0
        %1623 = vmatprep.subr.mxu0 0.0
        %1624 = vmatpush2.msra.mxu0 0.0
        %1625 = vmatprep.mubr.f32.mxu0 0.0
        %1626 = vmatmul.mubr.f32.gmra.mxu0 %v1538
        %v1627 = vpop.f32.mrf.mxu0
        %v1628 = vadd.f32 0.0, %v1627
        %v1629 = vpop.f32.mrf.mxu0
        %1630 = vmatprep.mubr.f32.mxu0 0.0
        %1631 = vmatmul.mubr.f32.gmra.mxu0 %v1541
        %v1632 = vpop.f32.mrf.mxu0
        %v1633 = vadd.f32 0.0, %v1632
        %v1634 = vpop.f32.mrf.mxu0
        %1635 = vmatprep.mubr.f32.mxu0 0.0
        %1636 = vmatmul.mubr.f32.gmra.mxu0 %v1544
        %v1637 = vpop.f32.mrf.mxu0
        %v1638 = vadd.f32 0.0, %v1637
        %v1639 = vpop.f32.mrf.mxu0
        %1640 = vmatprep.mubr.f32.mxu0 0.0
        %1641 = vmatmul.mubr.f32.gmra.mxu0 %v1547
        %v1642 = vpop.f32.mrf.mxu0
        %v1643 = vadd.f32 0.0, %v1642
        %v1644 = vpop.f32.mrf.mxu0
        %1645 = vmatprep.mubr.f32.mxu0 0.0
        %1646 = vmatmul.mubr.f32.gmra.mxu0 %v1550
        %v1647 = vpop.f32.mrf.mxu0
        %v1648 = vadd.f32 0.0, %v1647
        %v1649 = vpop.f32.mrf.mxu0
        %1650 = vmatprep.mubr.f32.mxu0 0.0
        %1651 = vmatmul.mubr.f32.gmra.mxu0 %v1553
        %v1652 = vpop.f32.mrf.mxu0
        %v1653 = vadd.f32 0.0, %v1652
        %v1654 = vpop.f32.mrf.mxu0
        %1655 = vmatprep.mubr.f32.mxu0 0.0
        %1656 = vmatmul.mubr.f32.gmra.mxu0 %v1556
        %v1657 = vpop.f32.mrf.mxu0
        %v1658 = vadd.f32 0.0, %v1657
        %v1659 = vpop.f32.mrf.mxu0
        %1660 = vmatprep.mubr.f32.mxu0 0.0
        %1661 = vmatmul.mubr.f32.gmra.mxu0 %v1559
        %v1662 = vpop.f32.mrf.mxu0
        %v1663 = vadd.f32 0.0, %v1662
        %v1664 = vpop.f32.mrf.mxu0
        %1665 = vdwg.mxu0
        %v1667 = vsel %vm240, %v1529, 0
        %v1670 = vsel %vm240, %v1530, 0
        %v1673 = vsel %vm240, %v1531, 0
        %v1676 = vsel %vm240, %v1532, 0
        %v1679 = vsel %vm240, %v1533, 0
        %v1682 = vsel %vm240, %v1534, 0
        %v1685 = vsel %vm240, %v1535, 0
        %v1688 = vsel %vm240, %v1536, 0
        %1690 = vmatprep.subr.mxu0 0.0
        %1691 = vmatpush1.msra.mxu0 0.0
        %1692 = vmatprep.subr.mxu0 0.0
        %1693 = vmatpush1.msra.mxu0 0.0
        %1694 = vmatprep.subr.mxu0 0.0
        %1695 = vmatpush1.msra.mxu0 0.0
        %1696 = vmatprep.subr.mxu0 0.0
        %1697 = vmatpush1.msra.mxu0 0.0
        %1698 = vmatprep.subr.mxu0 0.0
        %1699 = vmatpush1.msra.mxu0 0.0
        %1700 = vmatprep.subr.mxu0 0.0
        %1701 = vmatpush1.msra.mxu0 0.0
        %1702 = vmatprep.subr.mxu0 0.0
        %1703 = vmatpush1.msra.mxu0 0.0
        %1704 = vmatprep.subr.mxu0 0.0
        %1705 = vmatpush1.msra.mxu0 0.0
        %1706 = vmatprep.subr.mxu0 0.0
        %1707 = vmatpush1.msra.mxu0 0.0
        %1708 = vmatprep.subr.mxu0 0.0
        %1709 = vmatpush1.msra.mxu0 0.0
        %1710 = vmatprep.subr.mxu0 0.0
        %1711 = vmatpush1.msra.mxu0 0.0
        %1712 = vmatprep.subr.mxu0 0.0
        %1713 = vmatpush1.msra.mxu0 0.0
        %1714 = vmatprep.subr.mxu0 0.0
        %1715 = vmatpush1.msra.mxu0 %v1512
        %1716 = vmatprep.subr.mxu0 0.0
        %1717 = vmatpush1.msra.mxu0 %v1511
        %1718 = vmatprep.subr.mxu0 0.0
        %1719 = vmatpush1.msra.mxu0 %v1510
        %1720 = vmatprep.subr.mxu0 0.0
        %1721 = vmatpush1.msra.mxu0 %v1509
        %1722 = vmatprep.subr.mxu0 0.0
        %1723 = vmatpush2.msra.mxu0 0.0
        %1724 = vmatprep.subr.mxu0 0.0
        %1725 = vmatpush2.msra.mxu0 0.0
        %1726 = vmatprep.subr.mxu0 0.0
        %1727 = vmatpush2.msra.mxu0 0.0
        %1728 = vmatprep.subr.mxu0 0.0
        %1729 = vmatpush2.msra.mxu0 0.0
        %1730 = vmatprep.subr.mxu0 0.0
        %1731 = vmatpush2.msra.mxu0 0.0
        %1732 = vmatprep.subr.mxu0 0.0
        %1733 = vmatpush2.msra.mxu0 0.0
        %1734 = vmatprep.subr.mxu0 0.0
        %1735 = vmatpush2.msra.mxu0 0.0
        %1736 = vmatprep.subr.mxu0 0.0
        %1737 = vmatpush2.msra.mxu0 0.0
        %1738 = vmatprep.subr.mxu0 0.0
        %1739 = vmatpush2.msra.mxu0 0.0
        %1740 = vmatprep.subr.mxu0 0.0
        %1741 = vmatpush2.msra.mxu0 0.0
        %1742 = vmatprep.subr.mxu0 0.0
        %1743 = vmatpush2.msra.mxu0 0.0
        %1744 = vmatprep.subr.mxu0 0.0
        %1745 = vmatpush2.msra.mxu0 0.0
        %1746 = vmatprep.subr.mxu0 0.0
        %1747 = vmatpush2.msra.mxu0 0.0
        %1748 = vmatprep.subr.mxu0 0.0
        %1749 = vmatpush2.msra.mxu0 0.0
        %1750 = vmatprep.subr.mxu0 0.0
        %1751 = vmatpush2.msra.mxu0 0.0
        %1752 = vmatprep.subr.mxu0 0.0
        %1753 = vmatpush2.msra.mxu0 0.0
        %1754 = vmatprep.mubr.f32.mxu0 0.0
        %1755 = vmatmul.mubr.f32.gmra.mxu0 %v1667
        %v1756 = vpop.f32.mrf.mxu0
        %v1757 = vadd.f32 %v1628, %v1756
        %v1758 = vpop.f32.mrf.mxu0
        %1759 = vmatprep.mubr.f32.mxu0 0.0
        %1760 = vmatmul.mubr.f32.gmra.mxu0 %v1670
        %v1761 = vpop.f32.mrf.mxu0
        %v1762 = vadd.f32 %v1633, %v1761
        %v1763 = vpop.f32.mrf.mxu0
        %1764 = vmatprep.mubr.f32.mxu0 0.0
        %1765 = vmatmul.mubr.f32.gmra.mxu0 %v1673
        %v1766 = vpop.f32.mrf.mxu0
        %v1767 = vadd.f32 %v1638, %v1766
        %v1768 = vpop.f32.mrf.mxu0
        %1769 = vmatprep.mubr.f32.mxu0 0.0
        %1770 = vmatmul.mubr.f32.gmra.mxu0 %v1676
        %v1771 = vpop.f32.mrf.mxu0
        %v1772 = vadd.f32 %v1643, %v1771
        %v1773 = vpop.f32.mrf.mxu0
        %1774 = vmatprep.mubr.f32.mxu0 0.0
        %1775 = vmatmul.mubr.f32.gmra.mxu0 %v1679
        %v1776 = vpop.f32.mrf.mxu0
        %v1777 = vadd.f32 %v1648, %v1776
        %v1778 = vpop.f32.mrf.mxu0
        %1779 = vmatprep.mubr.f32.mxu0 0.0
        %1780 = vmatmul.mubr.f32.gmra.mxu0 %v1682
        %v1781 = vpop.f32.mrf.mxu0
        %v1782 = vadd.f32 %v1653, %v1781
        %v1783 = vpop.f32.mrf.mxu0
        %1784 = vmatprep.mubr.f32.mxu0 0.0
        %1785 = vmatmul.mubr.f32.gmra.mxu0 %v1685
        %v1786 = vpop.f32.mrf.mxu0
        %v1787 = vadd.f32 %v1658, %v1786
        %v1788 = vpop.f32.mrf.mxu0
        %1789 = vmatprep.mubr.f32.mxu0 0.0
        %1790 = vmatmul.mubr.f32.gmra.mxu0 %v1688
        %v1791 = vpop.f32.mrf.mxu0
        %v1792 = vadd.f32 %v1663, %v1791
        %v1793 = vpop.f32.mrf.mxu0
        %1794 = vdwg.mxu0
        %v1795 = vld [vmem:[#allocation2 + $0xc] sm:$0xff]
        %v1796 = vld [vmem:[#allocation2 + $0x14] sm:$0xff]
        %v1797 = vld [vmem:[#allocation2 + $0x1c] sm:$0xff]
        %v1798 = vld [vmem:[#allocation2 + $0x24] sm:$0xff]
        %v1799 = vld [vmem:[#allocation2 + $0x2c] sm:$0xff]
        %v1800 = vld [vmem:[#allocation2 + $0x34] sm:$0xff]
        %v1801 = vld [vmem:[#allocation2 + $0x3c] sm:$0xff]
        %v1802 = vld [vmem:[#allocation2 + $0x44] sm:$0xff]
        %v1804 = vsel %vm240, %v1795, 0
        %v1807 = vsel %vm240, %v1796, 0
        %v1810 = vsel %vm240, %v1797, 0
        %v1813 = vsel %vm240, %v1798, 0
        %v1816 = vsel %vm240, %v1799, 0
        %v1819 = vsel %vm240, %v1800, 0
        %v1822 = vsel %vm240, %v1801, 0
        %v1825 = vsel %vm240, %v1802, 0
        %1827 = vmatprep.subr.mxu0 0.0
        %1828 = vmatpush1.msra.mxu0 0.0
        %1829 = vmatprep.subr.mxu0 0.0
        %1830 = vmatpush1.msra.mxu0 0.0
        %1831 = vmatprep.subr.mxu0 0.0
        %1832 = vmatpush1.msra.mxu0 0.0
        %1833 = vmatprep.subr.mxu0 0.0
        %1834 = vmatpush1.msra.mxu0 0.0
        %1835 = vmatprep.subr.mxu0 0.0
        %1836 = vmatpush1.msra.mxu0 0.0
        %1837 = vmatprep.subr.mxu0 0.0
        %1838 = vmatpush1.msra.mxu0 0.0
        %1839 = vmatprep.subr.mxu0 0.0
        %1840 = vmatpush1.msra.mxu0 0.0
        %1841 = vmatprep.subr.mxu0 0.0
        %1842 = vmatpush1.msra.mxu0 0.0
        %1843 = vmatprep.subr.mxu0 0.0
        %1844 = vmatpush1.msra.mxu0 0.0
        %1845 = vmatprep.subr.mxu0 0.0
        %1846 = vmatpush1.msra.mxu0 0.0
        %1847 = vmatprep.subr.mxu0 0.0
        %1848 = vmatpush1.msra.mxu0 0.0
        %1849 = vmatprep.subr.mxu0 0.0
        %1850 = vmatpush1.msra.mxu0 0.0
        %1851 = vmatprep.subr.mxu0 0.0
        %1852 = vmatpush1.msra.mxu0 %v1520
        %1853 = vmatprep.subr.mxu0 0.0
        %1854 = vmatpush1.msra.mxu0 %v1519
        %1855 = vmatprep.subr.mxu0 0.0
        %1856 = vmatpush1.msra.mxu0 %v1518
        %1857 = vmatprep.subr.mxu0 0.0
        %1858 = vmatpush1.msra.mxu0 %v1517
        %1859 = vmatprep.subr.mxu0 0.0
        %1860 = vmatpush2.msra.mxu0 0.0
        %1861 = vmatprep.subr.mxu0 0.0
        %1862 = vmatpush2.msra.mxu0 0.0
        %1863 = vmatprep.subr.mxu0 0.0
        %1864 = vmatpush2.msra.mxu0 0.0
        %1865 = vmatprep.subr.mxu0 0.0
        %1866 = vmatpush2.msra.mxu0 0.0
        %1867 = vmatprep.subr.mxu0 0.0
        %1868 = vmatpush2.msra.mxu0 0.0
        %1869 = vmatprep.subr.mxu0 0.0
        %1870 = vmatpush2.msra.mxu0 0.0
        %1871 = vmatprep.subr.mxu0 0.0
        %1872 = vmatpush2.msra.mxu0 0.0
        %1873 = vmatprep.subr.mxu0 0.0
        %1874 = vmatpush2.msra.mxu0 0.0
        %1875 = vmatprep.subr.mxu0 0.0
        %1876 = vmatpush2.msra.mxu0 0.0
        %1877 = vmatprep.subr.mxu0 0.0
        %1878 = vmatpush2.msra.mxu0 0.0
        %1879 = vmatprep.subr.mxu0 0.0
        %1880 = vmatpush2.msra.mxu0 0.0
        %1881 = vmatprep.subr.mxu0 0.0
        %1882 = vmatpush2.msra.mxu0 0.0
        %1883 = vmatprep.subr.mxu0 0.0
        %1884 = vmatpush2.msra.mxu0 0.0
        %1885 = vmatprep.subr.mxu0 0.0
        %1886 = vmatpush2.msra.mxu0 0.0
        %1887 = vmatprep.subr.mxu0 0.0
        %1888 = vmatpush2.msra.mxu0 0.0
        %1889 = vmatprep.subr.mxu0 0.0
        %1890 = vmatpush2.msra.mxu0 0.0
        %1891 = vmatprep.mubr.f32.mxu0 0.0
        %1892 = vmatmul.mubr.f32.gmra.mxu0 %v1804
        %v1893 = vpop.f32.mrf.mxu0
        %v1894 = vadd.f32 0.0, %v1893
        %v1895 = vpop.f32.mrf.mxu0
        %1896 = vmatprep.mubr.f32.mxu0 0.0
        %1897 = vmatmul.mubr.f32.gmra.mxu0 %v1807
        %v1898 = vpop.f32.mrf.mxu0
        %v1899 = vadd.f32 0.0, %v1898
        %v1900 = vpop.f32.mrf.mxu0
        %1901 = vmatprep.mubr.f32.mxu0 0.0
        %1902 = vmatmul.mubr.f32.gmra.mxu0 %v1810
        %v1903 = vpop.f32.mrf.mxu0
        %v1904 = vadd.f32 0.0, %v1903
        %v1905 = vpop.f32.mrf.mxu0
        %1906 = vmatprep.mubr.f32.mxu0 0.0
        %1907 = vmatmul.mubr.f32.gmra.mxu0 %v1813
        %v1908 = vpop.f32.mrf.mxu0
        %v1909 = vadd.f32 0.0, %v1908
        %v1910 = vpop.f32.mrf.mxu0
        %1911 = vmatprep.mubr.f32.mxu0 0.0
        %1912 = vmatmul.mubr.f32.gmra.mxu0 %v1816
        %v1913 = vpop.f32.mrf.mxu0
        %v1914 = vadd.f32 0.0, %v1913
        %v1915 = vpop.f32.mrf.mxu0
        %1916 = vmatprep.mubr.f32.mxu0 0.0
        %1917 = vmatmul.mubr.f32.gmra.mxu0 %v1819
        %v1918 = vpop.f32.mrf.mxu0
        %v1919 = vadd.f32 0.0, %v1918
        %v1920 = vpop.f32.mrf.mxu0
        %1921 = vmatprep.mubr.f32.mxu0 0.0
        %1922 = vmatmul.mubr.f32.gmra.mxu0 %v1822
        %v1923 = vpop.f32.mrf.mxu0
        %v1924 = vadd.f32 0.0, %v1923
        %v1925 = vpop.f32.mrf.mxu0
        %1926 = vmatprep.mubr.f32.mxu0 0.0
        %1927 = vmatmul.mubr.f32.gmra.mxu0 %v1825
        %v1928 = vpop.f32.mrf.mxu0
        %v1929 = vadd.f32 0.0, %v1928
        %v1930 = vpop.f32.mrf.mxu0
        %1931 = vdwg.mxu0
        %v1932 = vadd.f32 %v1757, %v1894
        %v1933 = vadd.f32 %v1762, %v1899
        %v1934 = vadd.f32 %v1767, %v1904
        %v1935 = vadd.f32 %v1772, %v1909
        %v1936 = vadd.f32 %v1777, %v1914
        %v1937 = vadd.f32 %v1782, %v1919
        %v1938 = vadd.f32 %v1787, %v1924
        %v1939 = vadd.f32 %v1792, %v1929
        %s1940 = scalar_lea.vmem %s2, 2
        %v1941 = vld [vmem:[%s1940] sm:$0x1]
        %v1943 = vlaneseq
        %v1944 = vshrl.u32 %v1943, 7
        %v1945 = vsub.s32 0, %v1944
        %v1946 = vrot.slane %v1941, %v1945
        %v1948 = vadd.f32 %v1932, %v1946
        %v1949 = vadd.f32 %v1933, %v1946
        %v1950 = vadd.f32 %v1934, %v1946
        %v1951 = vadd.f32 %v1935, %v1946
        %v1952 = vadd.f32 %v1936, %v1946
        %v1953 = vadd.f32 %v1937, %v1946
        %v1954 = vadd.f32 %v1938, %v1946
        %v1955 = vadd.f32 %v1939, %v1946
        %v1956 = vmax.f32 %v1948, 0.0
        %v1957 = vmax.f32 %v1949, 0.0
        %v1958 = vmax.f32 %v1950, 0.0
        %v1959 = vmax.f32 %v1951, 0.0
        %v1960 = vmax.f32 %v1952, 0.0
        %v1961 = vmax.f32 %v1953, 0.0
        %v1962 = vmax.f32 %v1954, 0.0
        %v1963 = vmax.f32 %v1955, 0.0
        %s1964 = scalar_lea.vmem %s3, 64
        %v1965 = vld [vmem:[%s1964] sm:$0xff]
        %v1966 = vld [vmem:[%s1964 + $0x8] sm:$0xff]
        %v1967 = vld [vmem:[%s1964 + $0x10] sm:$0xff]
        %v1968 = vld [vmem:[%s1964 + $0x18] sm:$0xff]
        %s1969 = scalar_lea.vmem %s4, 2
        %v1970 = vld [vmem:[%s1969] sm:$0x1]
        %v1972 = vlaneseq
        %v1973 = vshrl.u32 %v1972, 7
        %v1974 = vsub.s32 0, %v1973
        %v1975 = vrot.slane %v1970, %v1974
        %v1978 = vsel %vm240, %v1956, 0
        %v1981 = vsel %vm240, %v1957, 0
        %v1984 = vsel %vm240, %v1958, 0
        %v1987 = vsel %vm240, %v1959, 0
        %v1990 = vsel %vm240, %v1960, 0
        %v1993 = vsel %vm240, %v1961, 0
        %v1996 = vsel %vm240, %v1962, 0
        %v1999 = vsel %vm240, %v1963, 0
        %2001 = vmatprep.subr.mxu0 0.0
        %2002 = vmatpush1.msra.mxu0 0.0
        %2003 = vmatprep.subr.mxu0 0.0
        %2004 = vmatpush1.msra.mxu0 0.0
        %2005 = vmatprep.subr.mxu0 0.0
        %2006 = vmatpush1.msra.mxu0 0.0
        %2007 = vmatprep.subr.mxu0 0.0
        %2008 = vmatpush1.msra.mxu0 0.0
        %2009 = vmatprep.subr.mxu0 0.0
        %2010 = vmatpush1.msra.mxu0 0.0
        %2011 = vmatprep.subr.mxu0 0.0
        %2012 = vmatpush1.msra.mxu0 0.0
        %2013 = vmatprep.subr.mxu0 0.0
        %2014 = vmatpush1.msra.mxu0 0.0
        %2015 = vmatprep.subr.mxu0 0.0
        %2016 = vmatpush1.msra.mxu0 0.0
        %2017 = vmatprep.subr.mxu0 0.0
        %2018 = vmatpush1.msra.mxu0 0.0
        %2019 = vmatprep.subr.mxu0 0.0
        %2020 = vmatpush1.msra.mxu0 0.0
        %2021 = vmatprep.subr.mxu0 0.0
        %2022 = vmatpush1.msra.mxu0 0.0
        %2023 = vmatprep.subr.mxu0 0.0
        %2024 = vmatpush1.msra.mxu0 0.0
        %2025 = vmatprep.subr.mxu0 0.0
        %2026 = vmatpush1.msra.mxu0 %v1968
        %2027 = vmatprep.subr.mxu0 0.0
        %2028 = vmatpush1.msra.mxu0 %v1967
        %2029 = vmatprep.subr.mxu0 0.0
        %2030 = vmatpush1.msra.mxu0 %v1966
        %2031 = vmatprep.subr.mxu0 0.0
        %2032 = vmatpush1.msra.mxu0 %v1965
        %2033 = vmatprep.subr.mxu0 0.0
        %2034 = vmatpush2.msra.mxu0 0.0
        %2035 = vmatprep.subr.mxu0 0.0
        %2036 = vmatpush2.msra.mxu0 0.0
        %2037 = vmatprep.subr.mxu0 0.0
        %2038 = vmatpush2.msra.mxu0 0.0
        %2039 = vmatprep.subr.mxu0 0.0
        %2040 = vmatpush2.msra.mxu0 0.0
        %2041 = vmatprep.subr.mxu0 0.0
        %2042 = vmatpush2.msra.mxu0 0.0
        %2043 = vmatprep.subr.mxu0 0.0
        %2044 = vmatpush2.msra.mxu0 0.0
        %2045 = vmatprep.subr.mxu0 0.0
        %2046 = vmatpush2.msra.mxu0 0.0
        %2047 = vmatprep.subr.mxu0 0.0
        %2048 = vmatpush2.msra.mxu0 0.0
        %2049 = vmatprep.subr.mxu0 0.0
        %2050 = vmatpush2.msra.mxu0 0.0
        %2051 = vmatprep.subr.mxu0 0.0
        %2052 = vmatpush2.msra.mxu0 0.0
        %2053 = vmatprep.subr.mxu0 0.0
        %2054 = vmatpush2.msra.mxu0 0.0
        %2055 = vmatprep.subr.mxu0 0.0
        %2056 = vmatpush2.msra.mxu0 0.0
        %2057 = vmatprep.subr.mxu0 0.0
        %2058 = vmatpush2.msra.mxu0 0.0
        %2059 = vmatprep.subr.mxu0 0.0
        %2060 = vmatpush2.msra.mxu0 0.0
        %2061 = vmatprep.subr.mxu0 0.0
        %2062 = vmatpush2.msra.mxu0 0.0
        %2063 = vmatprep.subr.mxu0 0.0
        %2064 = vmatpush2.msra.mxu0 0.0
        %2065 = vmatprep.mubr.f32.mxu0 0.0
        %2066 = vmatmul.mubr.f32.gmra.mxu0 %v1978
        %v2067 = vpop.f32.mrf.mxu0
        %v2068 = vadd.f32 %v1975, %v2067
        %v2069 = vpop.f32.mrf.mxu0
        %2070 = vmatprep.mubr.f32.mxu0 0.0
        %2071 = vmatmul.mubr.f32.gmra.mxu0 %v1981
        %v2072 = vpop.f32.mrf.mxu0
        %v2073 = vadd.f32 %v1975, %v2072
        %v2074 = vpop.f32.mrf.mxu0
        %2075 = vmatprep.mubr.f32.mxu0 0.0
        %2076 = vmatmul.mubr.f32.gmra.mxu0 %v1984
        %v2077 = vpop.f32.mrf.mxu0
        %v2078 = vadd.f32 %v1975, %v2077
        %v2079 = vpop.f32.mrf.mxu0
        %2080 = vmatprep.mubr.f32.mxu0 0.0
        %2081 = vmatmul.mubr.f32.gmra.mxu0 %v1987
        %v2082 = vpop.f32.mrf.mxu0
        %v2083 = vadd.f32 %v1975, %v2082
        %v2084 = vpop.f32.mrf.mxu0
        %2085 = vmatprep.mubr.f32.mxu0 0.0
        %2086 = vmatmul.mubr.f32.gmra.mxu0 %v1990
        %v2087 = vpop.f32.mrf.mxu0
        %v2088 = vadd.f32 %v1975, %v2087
        %v2089 = vpop.f32.mrf.mxu0
        %2090 = vmatprep.mubr.f32.mxu0 0.0
        %2091 = vmatmul.mubr.f32.gmra.mxu0 %v1993
        %v2092 = vpop.f32.mrf.mxu0
        %v2093 = vadd.f32 %v1975, %v2092
        %v2094 = vpop.f32.mrf.mxu0
        %2095 = vmatprep.mubr.f32.mxu0 0.0
        %2096 = vmatmul.mubr.f32.gmra.mxu0 %v1996
        %v2097 = vpop.f32.mrf.mxu0
        %v2098 = vadd.f32 %v1975, %v2097
        %v2099 = vpop.f32.mrf.mxu0
        %2100 = vmatprep.mubr.f32.mxu0 0.0
        %2101 = vmatmul.mubr.f32.gmra.mxu0 %v1999
        %v2102 = vpop.f32.mrf.mxu0
        %v2103 = vadd.f32 %v1975, %v2102
        %v2104 = vpop.f32.mrf.mxu0
        %2105 = vdwg.mxu0
        %v2106 = vmax.f32 %v2068, 0.0
        %v2107 = vmax.f32 %v2073, 0.0
        %v2108 = vmax.f32 %v2078, 0.0
        %v2109 = vmax.f32 %v2083, 0.0
        %v2110 = vmax.f32 %v2088, 0.0
        %v2111 = vmax.f32 %v2093, 0.0
        %v2112 = vmax.f32 %v2098, 0.0
        %v2113 = vmax.f32 %v2103, 0.0
        %v2114 = vadd.f32 %v1521, %v2106
        %v2115 = vadd.f32 %v1522, %v2107
        %v2116 = vadd.f32 %v1523, %v2108
        %v2117 = vadd.f32 %v1524, %v2109
        %v2118 = vadd.f32 %v1525, %v2110
        %v2119 = vadd.f32 %v1526, %v2111
        %v2120 = vadd.f32 %v1527, %v2112
        %v2121 = vadd.f32 %v1528, %v2113
        %2122 = vst.msk [vmem:[#allocation2 + $0x8] sm:$0xff] %vm240, %v2114
        %2123 = vst.msk [vmem:[#allocation2 + $0x10] sm:$0xff] %vm240, %v2115
        %2124 = vst.msk [vmem:[#allocation2 + $0x18] sm:$0xff] %vm240, %v2116
        %2125 = vst.msk [vmem:[#allocation2 + $0x20] sm:$0xff] %vm240, %v2117
        %2126 = vst.msk [vmem:[#allocation2 + $0x28] sm:$0xff] %vm240, %v2118
        %2127 = vst.msk [vmem:[#allocation2 + $0x30] sm:$0xff] %vm240, %v2119
        %2128 = vst.msk [vmem:[#allocation2 + $0x38] sm:$0xff] %vm240, %v2120
        %2129 = vst.msk [vmem:[#allocation2 + $0x40] sm:$0xff] %vm240, %v2121
        %v2130 = vld [vmem:[#allocation2 + $0x8] sm:$0xff]
        %v2131 = vld [vmem:[#allocation2 + $0x10] sm:$0xff]
        %v2132 = vld [vmem:[#allocation2 + $0x18] sm:$0xff]
        %v2133 = vld [vmem:[#allocation2 + $0x20] sm:$0xff]
        %v2134 = vld [vmem:[#allocation2 + $0x28] sm:$0xff]
        %v2135 = vld [vmem:[#allocation2 + $0x30] sm:$0xff]
        %v2136 = vld [vmem:[#allocation2 + $0x38] sm:$0xff]
        %v2137 = vld [vmem:[#allocation2 + $0x40] sm:$0xff]
        %2138 = vst.msk [vmem:[%s239] sm:$0xff] %vm240, %v2130
        %2139 = vst.msk [vmem:[%s239 + $0x8] sm:$0xff] %vm240, %v2131
        %2140 = vst.msk [vmem:[%s239 + $0x10] sm:$0xff] %vm240, %v2132
        %2141 = vst.msk [vmem:[%s239 + $0x18] sm:$0xff] %vm240, %v2133
        %2142 = vst.msk [vmem:[%s239 + $0x20] sm:$0xff] %vm240, %v2134
        %2143 = vst.msk [vmem:[%s239 + $0x28] sm:$0xff] %vm240, %v2135
        %2144 = vst.msk [vmem:[%s239 + $0x30] sm:$0xff] %vm240, %v2136
        %2145 = vst.msk [vmem:[%s239 + $0x38] sm:$0xff] %vm240, %v2137
        %p2146 = scmp.lt.s32.totalorder %s17, 1
        %s2147 = scalar_select %p2146, %s17, 1
        %s2148 = smul.addr %s2147, 8
        %s2149 = smul.addr %s2148, 8
        %s2150 = scalar_lea.vmem %s5, %s2149
        // Predicated region
        $region45: #{resnet1d_forward.1} parent=39 // pred_check
          %p2151 = pneg %p145
        $region46: #{resnet1d_forward.1} parent=39 // pred_check_branch
          %2153 = sbr.rel (%p2151) target = $region48
        $region47: #{resnet1d_forward.1} parent=39 // pred_region
          _
        $region48: #{resnet1d_forward.1} parent=39 // pred_fallthru
          _
      $region40: #{resnet1d_forward.1} parent=5 // pred_fallthru
        _
      %p2154 = scmp.le.s32.totalorder 2, %s12
      // Predicated region
      $region49: #{resnet1d_forward.1} parent=5 // pred_check
        %p2155 = pneg %p2154
      $region50: #{resnet1d_forward.1} parent=5 // pred_check_branch
        %2157 = sbr.rel (%p2155) target = $region52
      $region51: #{resnet1d_forward.1} parent=5 // pred_region
        %s2158 = ssub.s32 %s12, 2
        // Predicated region
        $region53: #{resnet1d_forward.1} parent=51 // pred_check
          %p2159 = pneg %p151
        $region54: #{resnet1d_forward.1} parent=51 // pred_check_branch
          %2161 = sbr.rel (%p2159) target = $region56
        $region55: #{resnet1d_forward.1} parent=51 // pred_region
          %p2162 = scmp.lt.s32.totalorder %s18, 1
          %s2163 = scalar_select %p2162, %s18, 1
          %s2164 = smul.addr %s2163, 8
          %s2165 = smul.addr %s2164, 8
          %s2166 = scalar_lea.vmem %s5, %s2165
        $region56: #{resnet1d_forward.1} parent=51 // pred_fallthru
          _
      $region52: #{resnet1d_forward.1} parent=5 // pred_fallthru
        _
    $region6: #{resnet1d_forward.1} parent=1 // loop_footer
      %s16 = sadd.s32 1, %s12
    $region7: #{resnet1d_forward.1} parent=1 // loop_footer_branch
      %11 = sbr.rel target = $region3
    $region8: #{resnet1d_forward.1} parent=1 // loop_exit
      _
    %2167 = vsyncpa [#allocation4], 1
    %s2168 = scalar_lea.sflag [#allocation4], 1
    %2169 = vsyncpa %s2168, 1

</llo_original>
